<compile_context>
chip_gen: v6e
topology: v6e:2x2x1
jax: 0.10.0
libtpu: 0.0.40
codegen_flags: <defaults>
</compile_context>

<pallas_src>
import math

import jax
import jax.numpy as jnp
from jax.experimental import pallas as pl
from jax.experimental.pallas import tpu as pltpu


# ----------------------------------------------------------------------------
# Layout helpers (wrapper side, plain JAX)
# ----------------------------------------------------------------------------
def _round_up(x, m):
    return ((x + m - 1) // m) * m


def _interior_mask(H, W, EP):
    Hp, Wp = H + 2, W + 2
    m = jnp.zeros((Hp, Wp), jnp.float32).at[1:H + 1, 1:W + 1].set(1.0)
    m = m.reshape(1, Hp * Wp)
    return jnp.pad(m, ((0, 0), (0, EP - Hp * Wp)))


def _to_padded_flat(x_nchw, EP):
    N, C, H, W = x_nchw.shape
    xp = jnp.pad(x_nchw, ((0, 0), (0, 0), (1, 1), (1, 1)))
    xf = xp.reshape(N, C, (H + 2) * (W + 2))
    return jnp.pad(xf, ((0, 0), (0, 0), (0, EP - (H + 2) * (W + 2))))


def _from_padded_flat(xf, H, W):
    N, C, _ = xf.shape
    x = xf[:, :, :(H + 2) * (W + 2)].reshape(N, C, H + 2, W + 2)
    return x[:, :, 1:H + 1, 1:W + 1]


def _hwoi(w):      # HWIO -> HWOI so the kernel can index w[dy, dx] -> (Cout, Cin)
    return jnp.transpose(w, (0, 1, 3, 2))


def _col(b):       # per-channel vector -> (C, 1) column for sublane broadcast
    return b.reshape(-1, 1)


# ----------------------------------------------------------------------------
# In-kernel building blocks
# ----------------------------------------------------------------------------
def _fill_ext(ext_ref, x, P):
    """Copy the padded-flat activation into a zero-extended VMEM scratch so
    every 3x3 tap becomes a contiguous lane slice ext[:, dy*Wp+dx : +EP]."""
    ext_ref[...] = jnp.zeros(ext_ref.shape, ext_ref.dtype)
    ext_ref[:, pl.ds(P, x.shape[1])] = x


def _conv_taps(ext_ref, w, Wp, EP):
    """w: (KH, KW, Cout, Cin). Returns the un-biased (Cout, EP) f32 accumulator."""
    KH, KW, Cout, _ = w.shape
    acc = jnp.zeros((Cout, EP), jnp.float32)
    for dy in range(KH):                     # unrolled: KH*KW MXU matmuls
        for dx in range(KW):
            tap = ext_ref[:, pl.ds(dy * Wp + dx, EP)]          # (Cin, EP)
            acc = acc + jnp.dot(w[dy, dx], tap,
                                preferred_element_type=jnp.float32)
    return acc


# ----------------------------------------------------------------------------
# Fused kernels
# ----------------------------------------------------------------------------
def _make_head_kernel(Wp, EP, P):
    """sub_mean (per-channel affine) + 3x3 head conv, fused."""
    def kernel(x_ref, s_ref, t_ref, m_ref, w_ref, b_ref, o_ref, ext_ref):
        m = m_ref[...]
        x = (x_ref[0] * s_ref[...] + t_ref[...]) * m    # MeanShift(-1); halo stays 0
        _fill_ext(ext_ref, x, P)
        acc = _conv_taps(ext_ref, w_ref[...], Wp, EP)
        o_ref[0] = (m * (acc + b_ref[...])).astype(o_ref.dtype)
    return kernel


def _make_resblock_kernel(Wp, EP, P, res_scale):
    """Whole ResBlock in one kernel: conv -> ReLU -> conv -> x + res_scale*t."""
    def kernel(x_ref, m_ref, w1_ref, b1_ref, w2_ref, b2_ref, o_ref, ext_ref):
        m = m_ref[...]
        x = x_ref[0]
        _fill_ext(ext_ref, x, P)
        t = _conv_taps(ext_ref, w1_ref[...], Wp, EP)
        t = m * jnp.maximum(t + b1_ref[...], 0.0)
        _fill_ext(ext_ref, t, P)
        t = _conv_taps(ext_ref, w2_ref[...], Wp, EP)
        t = m * (t + b2_ref[...])
        o_ref[0] = (x + res_scale * t).astype(o_ref.dtype)
    return kernel


def _make_conv_skip_kernel(Wp, EP, P):
    """Final body conv fused with the global residual add (res + x)."""
    def kernel(x_ref, skip_ref, m_ref, w_ref, b_ref, o_ref, ext_ref):
        m = m_ref[...]
        _fill_ext(ext_ref, x_ref[0], P)
        acc = _conv_taps(ext_ref, w_ref[...], Wp, EP)
        o_ref[0] = (m * (acc + b_ref[...]) + skip_ref[0]).astype(o_ref.dtype)
    return kernel


def _make_conv_kernel(Wp, EP, P, relu=False):
    """Plain 3x3 conv (upsampler conv and tail conv with add_mean folded)."""
    def kernel(x_ref, m_ref, w_ref, b_ref, o_ref, ext_ref):
        m = m_ref[...]
        _fill_ext(ext_ref, x_ref[0], P)
        acc = _conv_taps(ext_ref, w_ref[...], Wp, EP)
        out = acc + b_ref[...]
        if relu:
            out = jnp.maximum(out, 0.0)
        o_ref[0] = (m * out).astype(o_ref.dtype)
    return kernel


# ----------------------------------------------------------------------------
# pallas_call wrapper
# ----------------------------------------------------------------------------
def _pcall(kernel, act_args, param_args, out_c, EP, ext_shape):
    N = act_args[0].shape[0]
    in_specs, args = [], []
    for a in act_args:                              # (N, C, EP) activations
        in_specs.append(pl.BlockSpec((1,) + a.shape[1:], lambda n: (n, 0, 0)))
        args.append(a)
    for p in param_args:                            # broadcast weights / masks
        in_specs.append(pl.BlockSpec(p.shape, lambda n, _nd=p.ndim: (0,) * _nd))
        args.append(p)
    return pl.pallas_call(
        kernel,
        out_shape=jax.ShapeDtypeStruct((N, out_c, EP), jnp.float32),
        grid=(N,),
        in_specs=in_specs,
        out_specs=pl.BlockSpec((1, out_c, EP), lambda n: (n, 0, 0)),
        scratch_shapes=[pltpu.VMEM(ext_shape, jnp.float32)],
        compiler_params=pltpu.CompilerParams(
            dimension_semantics=("parallel",),
            vmem_limit_bytes=32 * 1024 * 1024),
    )(*args)


# ----------------------------------------------------------------------------
# EDSR forward (Pallas path)
# ----------------------------------------------------------------------------
def edsr_forward_pallas(x_nchw, params, res_scale=1.0):
    N, Cin, H, W = x_nchw.shape
    wh, bh = params['head']
    F = wh.shape[-1]
    assert params['scale'] == 2, "demo config uses a single pixel-shuffle stage"

    Hp, Wp = H + 2, W + 2
    EP = _round_up(Hp * Wp, 128)
    P = Wp + 1
    H2, W2 = 2 * H, 2 * W
    H2p, W2p = H2 + 2, W2 + 2
    EP2 = _round_up(H2p * W2p, 128)
    P2 = W2p + 1

    m1 = _interior_mask(H, W, EP)
    m2 = _interior_mask(H2, W2, EP2)

    # --- fold the MeanShift "convs" (diagonal 1x1) ---
    sub_s, sub_t = params['sub_mean']                 # fused into head kernel
    add_s, add_t = params['add_mean']                 # folded into tail conv
    wt, bt = params['tail']
    wt = wt * add_s.reshape(1, 1, 1, -1)
    bt = bt * add_s + add_t

    x = _to_padded_flat(x_nchw, EP)                   # (N, 3, EP), zero halo

    # head: sub_mean + conv(3 -> F)
    x = _pcall(_make_head_kernel(Wp, EP, P),
               [x], [_col(sub_s), _col(sub_t), m1, _hwoi(wh), _col(bh)],
               F, EP, (Cin, EP + 2 * P))

    # body: fused ResBlocks, then final conv fused with the global skip
    res = x
    rb_kernel = _make_resblock_kernel(Wp, EP, P, float(res_scale))
    for (w1, b1), (w2, b2) in params['resblocks']:
        res = _pcall(rb_kernel,
                     [res], [m1, _hwoi(w1), _col(b1), _hwoi(w2), _col(b2)],
                     F, EP, (F, EP + 2 * P))
    wb, bb = params['body_tail']
    res = _pcall(_make_conv_skip_kernel(Wp, EP, P),
                 [res, x], [m1, _hwoi(wb), _col(bb)],
                 F, EP, (F, EP + 2 * P))

    # upsampler conv (F -> 4F)
    wu, bu = params['up']
    up = _pcall(_make_conv_kernel(Wp, EP, P),
                [res], [m1, _hwoi(wu), _col(bu)],
                4 * F, EP, (F, EP + 2 * P))

    # PixelShuffle(2): pure layout (XLA).
    # TODO(synk): fuse via sub-pixel-conv decomposition so the 4F activation
    #             never round-trips HBM.
    u = _from_padded_flat(up, H, W)                              # (N, 4F, H, W)
    u = u.reshape(N, F, 2, 2, H, W).transpose(0, 1, 4, 2, 5, 3)
    u = u.reshape(N, F, H2, W2)
    u = _to_padded_flat(u, EP2)                                  # (N, F, EP2)

    # tail conv (F -> 3) with add_mean folded in
    out = _pcall(_make_conv_kernel(W2p, EP2, P2),
                 [u], [m2, _hwoi(wt), _col(bt)],
                 3, EP2, (F, EP2 + 2 * P2))
    return _from_padded_flat(out, H2, W2)                        # (N, 3, 2H, 2W)


# ----------------------------------------------------------------------------
# Pure-JAX reference (mirrors the PyTorch module exactly), for verification
# ----------------------------------------------------------------------------
def edsr_forward_ref(x, params, res_scale=1.0):
    def conv(x, w, b, relu=False):
        y = jax.lax.conv_general_dilated(
            x, w, (1, 1), 'SAME',
            dimension_numbers=('NCHW', 'HWIO', 'NCHW'),
            precision=jax.lax.Precision.HIGHEST)
        y = y + b.reshape(1, -1, 1, 1)
        return jnp.maximum(y, 0.0) if relu else y

    sub_s, sub_t = params['sub_mean']
    add_s, add_t = params['add_mean']
    x = x * sub_s.reshape(1, 3, 1, 1) + sub_t.reshape(1, 3, 1, 1)   # MeanShift(-1)
    x = conv(x, *params['head'])
    res = x
    for (w1, b1), (w2, b2) in params['resblocks']:
        t = conv(res, w1, b1, relu=True)
        t = conv(t, w2, b2)
        res = res + res_scale * t
    res = conv(res, *params['body_tail']) + x
    t = conv(res, *params['up'])
    N, C, Hh, Ww = t.shape
    F = C // 4
    t = t.reshape(N, F, 2, 2, Hh, Ww).transpose(0, 1, 4, 2, 5, 3)
    t = t.reshape(N, F, 2 * Hh, 2 * Ww)                              # PixelShuffle(2)
    t = conv(t, *params['tail'])
    return t * add_s.reshape(1, 3, 1, 1) + add_t.reshape(1, 3, 1, 1)  # MeanShift(+1)


# ----------------------------------------------------------------------------
# Deterministic parameter construction (mirrors EDSR.__init__ shapes)
# ----------------------------------------------------------------------------
def _conv_params(key, cin, cout, k):
    kw, kb = jax.random.split(key)
    bound = 1.0 / math.sqrt(cin * k * k)
    w = jax.random.uniform(kw, (k, k, cin, cout), jnp.float32, -bound, bound)
    b = jax.random.uniform(kb, (cout,), jnp.float32, -bound, bound)
    return w, b


def init_edsr_params(key, n_resblocks, n_feats, n_colors, scale, rgb_range):
    assert scale == 2, "demo config uses a single pixel-shuffle stage"
    keys = jax.random.split(key, 4 + 2 * n_resblocks)
    ki = iter(keys)
    rgb_mean = jnp.array([0.4488, 0.4371, 0.4040], jnp.float32)
    rgb_std = jnp.array([1.0, 1.0, 1.0], jnp.float32)
    params = {
        'scale': scale,
        # MeanShift is a diagonal 1x1 conv -> per-channel (scale, shift)
        'sub_mean': (1.0 / rgb_std, -rgb_range * rgb_mean / rgb_std),
        'add_mean': (1.0 / rgb_std, rgb_range * rgb_mean / rgb_std),
        'head': _conv_params(next(ki), n_colors, n_feats, 3),
        'resblocks': [],
    }
    for _ in range(n_resblocks):
        params['resblocks'].append(
            (_conv_params(next(ki), n_feats, n_feats, 3),
             _conv_params(next(ki), n_feats, n_feats, 3)))
    params['body_tail'] = _conv_params(next(ki), n_feats, n_feats, 3)
    params['up'] = _conv_params(next(ki), n_feats, 4 * n_feats, 3)   # Upsampler conv
    params['tail'] = _conv_params(next(ki), n_feats, n_colors, 3)
    return params


if __name__ == "__main__":
    # args = {'n_resblocks': 2, 'n_feats': 8, 'scale': [2], 'rgb_range': 1.0,
    #         'n_colors': 3, 'res_scale': 1.0}   (small but structurally faithful)
    n_resblocks, n_feats, n_colors, scale = 2, 8, 3, 2
    rgb_range, res_scale = 1.0, 1.0

    params = init_edsr_params(jax.random.PRNGKey(1), n_resblocks, n_feats,
                              n_colors, scale, rgb_range)
    x = jax.random.uniform(jax.random.PRNGKey(0), (2, 3, 16, 16),
                           jnp.float32, 0.0, rgb_range)

    out = jax.block_until_ready(edsr_forward_pallas(x, params, res_scale))
    assert out.shape == (2, 3, 32, 32), out.shape
    assert bool(jnp.all(jnp.isfinite(out)))

    ref = jax.block_until_ready(edsr_forward_ref(x, params, res_scale))
    assert jnp.allclose(out, ref, rtol=2e-2, atol=2e-2), \
        float(jnp.max(jnp.abs(out - ref)))

    print("KERNEL_OK")
</pallas_src>

<mosaic_0001>
module attributes {stable_mosaic.version = 11 : i64} {
  func.func @kernel(%arg0: i32, %arg1: memref<1x3x384xf32, #tpu.memory_space<vmem>>, %arg2: memref<3x1xf32, #tpu.memory_space<vmem>>, %arg3: memref<3x1xf32, #tpu.memory_space<vmem>>, %arg4: memref<1x384xf32, #tpu.memory_space<vmem>>, %arg5: memref<3x3x8x3xf32, #tpu.memory_space<vmem>>, %arg6: memref<8x1xf32, #tpu.memory_space<vmem>>, %arg7: memref<1x8x384xf32, #tpu.memory_space<vmem>>, %arg8: memref<3x422xf32, #tpu.memory_space<vmem>>) attributes {dimension_semantics = [#tpu.dimension_semantics<parallel>], iteration_bounds = array<i64: 2>, scalar_prefetch = 0 : i64, scratch_operands = 1 : i64, tpu.core_type = #tpu.core_type<tc>, window_params = [{transform_indices = @transform_0, window_bounds = array<i64: 1, 3, 384>}, {pipeline_mode = #tpu.pipeline_mode<synchronous>, transform_indices = @transform_1, window_bounds = array<i64: 3, 1>}, {pipeline_mode = #tpu.pipeline_mode<synchronous>, transform_indices = @transform_2, window_bounds = array<i64: 3, 1>}, {pipeline_mode = #tpu.pipeline_mode<synchronous>, transform_indices = @transform_3, window_bounds = array<i64: 1, 384>}, {pipeline_mode = #tpu.pipeline_mode<synchronous>, transform_indices = @transform_4, window_bounds = array<i64: 3, 3, 8, 3>}, {pipeline_mode = #tpu.pipeline_mode<synchronous>, transform_indices = @transform_5, window_bounds = array<i64: 8, 1>}, {transform_indices = @transform_6, window_bounds = array<i64: 1, 8, 384>}]} {
    %c0 = arith.constant 0 : index
    %c0_0 = arith.constant 0 : index
    %0 = vector.load %arg4[%c0, %c0_0] : memref<1x384xf32, #tpu.memory_space<vmem>>, vector<1x384xf32>
    %c0_1 = arith.constant 0 : index
    %c0_2 = arith.constant 0 : index
    %c0_3 = arith.constant 0 : index
    %1 = vector.load %arg1[%c0_1, %c0_2, %c0_3] : memref<1x3x384xf32, #tpu.memory_space<vmem>>, vector<1x3x384xf32>
    %2 = vector.shape_cast %1 : vector<1x3x384xf32> to vector<3x384xf32>
    %c0_4 = arith.constant 0 : index
    %c0_5 = arith.constant 0 : index
    %3 = vector.load %arg2[%c0_4, %c0_5] : memref<3x1xf32, #tpu.memory_space<vmem>>, vector<3x1xf32>
    %4 = vector.broadcast %3 : vector<3x1xf32> to vector<3x384xf32>
    %5 = arith.mulf %2, %4 : vector<3x384xf32>
    %c0_6 = arith.constant 0 : index
    %c0_7 = arith.constant 0 : index
    %6 = vector.load %arg3[%c0_6, %c0_7] : memref<3x1xf32, #tpu.memory_space<vmem>>, vector<3x1xf32>
    %7 = vector.broadcast %6 : vector<3x1xf32> to vector<3x384xf32>
    %8 = arith.addf %5, %7 : vector<3x384xf32>
    %9 = vector.broadcast %0 : vector<1x384xf32> to vector<3x384xf32>
    %10 = arith.mulf %8, %9 : vector<3x384xf32>
    %cst = arith.constant 0.000000e+00 : f32
    %11 = vector.broadcast %cst : f32 to vector<3x422xf32>
    %c0_8 = arith.constant 0 : index
    %c0_9 = arith.constant 0 : index
    %12 = vector.load %arg8[%c0_8, %c0_9] : memref<3x422xf32, #tpu.memory_space<vmem>>, vector<3x422xf32>
    tpu.vector_store %arg8[%c0_8, %c0_9], %11 {strides = array<i32>} : memref<3x422xf32, #tpu.memory_space<vmem>>, vector<3x422xf32>,
    %c0_10 = arith.constant 0 : index
    %c19 = arith.constant 19 : index
    %13 = vector.load %arg8[%c0_10, %c19] : memref<3x422xf32, #tpu.memory_space<vmem>>, vector<3x384xf32>
    tpu.vector_store %arg8[%c0_10, %c19], %10 {strides = array<i32>} : memref<3x422xf32, #tpu.memory_space<vmem>>, vector<3x384xf32>,
    %c0_11 = arith.constant 0 : index
    %c0_12 = arith.constant 0 : index
    %c0_13 = arith.constant 0 : index
    %c0_14 = arith.constant 0 : index
    %14 = vector.load %arg5[%c0_11, %c0_12, %c0_13, %c0_14] : memref<3x3x8x3xf32, #tpu.memory_space<vmem>>, vector<3x3x8x3xf32>
    %cst_15 = arith.constant 0.000000e+00 : f32
    %15 = vector.broadcast %cst_15 : f32 to vector<8x384xf32>
    %c0_16 = arith.constant 0 : index
    %c0_17 = arith.constant 0 : index
    %16 = vector.load %arg8[%c0_16, %c0_17] : memref<3x422xf32, #tpu.memory_space<vmem>>, vector<3x384xf32>
    %17 = vector.extract_strided_slice %14 {offsets = [0, 0, 0, 0], sizes = [1, 1, 8, 3], strides = [1, 1, 1, 1]} : vector<3x3x8x3xf32> to vector<1x1x8x3xf32>
    %18 = vector.shape_cast %17 : vector<1x1x8x3xf32> to vector<8x3xf32>
    %cst_18 = arith.constant dense<0.000000e+00> : vector<8x384xf32>
    %19 = tpu.matmul %18, %16, %cst_18 {dimension_numbers = #tpu.dot_dimension_numbers<[1], [0], [0], [1], [0, 0, 1, 1], [], []>} : vector<8x3xf32>, vector<3x384xf32>, vector<8x384xf32> -> vector<8x384xf32>
    %20 = arith.addf %15, %19 : vector<8x384xf32>
    %c0_19 = arith.constant 0 : index
    %c1 = arith.constant 1 : index
    %21 = vector.load %arg8[%c0_19, %c1] : memref<3x422xf32, #tpu.memory_space<vmem>>, vector<3x384xf32>
    %22 = vector.extract_strided_slice %14 {offsets = [0, 1, 0, 0], sizes = [1, 1, 8, 3], strides = [1, 1, 1, 1]} : vector<3x3x8x3xf32> to vector<1x1x8x3xf32>
    %23 = vector.shape_cast %22 : vector<1x1x8x3xf32> to vector<8x3xf32>
    %cst_20 = arith.constant dense<0.000000e+00> : vector<8x384xf32>
    %24 = tpu.matmul %23, %21, %cst_20 {dimension_numbers = #tpu.dot_dimension_numbers<[1], [0], [0], [1], [0, 0, 1, 1], [], []>} : vector<8x3xf32>, vector<3x384xf32>, vector<8x384xf32> -> vector<8x384xf32>
    %25 = arith.addf %20, %24 : vector<8x384xf32>
    %c0_21 = arith.constant 0 : index
    %c2 = arith.constant 2 : index
    %26 = vector.load %arg8[%c0_21, %c2] : memref<3x422xf32, #tpu.memory_space<vmem>>, vector<3x384xf32>
    %27 = vector.extract_strided_slice %14 {offsets = [0, 2, 0, 0], sizes = [1, 1, 8, 3], strides = [1, 1, 1, 1]} : vector<3x3x8x3xf32> to vector<1x1x8x3xf32>
    %28 = vector.shape_cast %27 : vector<1x1x8x3xf32> to vector<8x3xf32>
    %cst_22 = arith.constant dense<0.000000e+00> : vector<8x384xf32>
    %29 = tpu.matmul %28, %26, %cst_22 {dimension_numbers = #tpu.dot_dimension_numbers<[1], [0], [0], [1], [0, 0, 1, 1], [], []>} : vector<8x3xf32>, vector<3x384xf32>, vector<8x384xf32> -> vector<8x384xf32>
    %30 = arith.addf %25, %29 : vector<8x384xf32>
    %c0_23 = arith.constant 0 : index
    %c18 = arith.constant 18 : index
    %31 = vector.load %arg8[%c0_23, %c18] : memref<3x422xf32, #tpu.memory_space<vmem>>, vector<3x384xf32>
    %32 = vector.extract_strided_slice %14 {offsets = [1, 0, 0, 0], sizes = [1, 1, 8, 3], strides = [1, 1, 1, 1]} : vector<3x3x8x3xf32> to vector<1x1x8x3xf32>
    %33 = vector.shape_cast %32 : vector<1x1x8x3xf32> to vector<8x3xf32>
    %cst_24 = arith.constant dense<0.000000e+00> : vector<8x384xf32>
    %34 = tpu.matmul %33, %31, %cst_24 {dimension_numbers = #tpu.dot_dimension_numbers<[1], [0], [0], [1], [0, 0, 1, 1], [], []>} : vector<8x3xf32>, vector<3x384xf32>, vector<8x384xf32> -> vector<8x384xf32>
    %35 = arith.addf %30, %34 : vector<8x384xf32>
    %c0_25 = arith.constant 0 : index
    %c19_26 = arith.constant 19 : index
    %36 = vector.load %arg8[%c0_25, %c19_26] : memref<3x422xf32, #tpu.memory_space<vmem>>, vector<3x384xf32>
    %37 = vector.extract_strided_slice %14 {offsets = [1, 1, 0, 0], sizes = [1, 1, 8, 3], strides = [1, 1, 1, 1]} : vector<3x3x8x3xf32> to vector<1x1x8x3xf32>
    %38 = vector.shape_cast %37 : vector<1x1x8x3xf32> to vector<8x3xf32>
    %cst_27 = arith.constant dense<0.000000e+00> : vector<8x384xf32>
    %39 = tpu.matmul %38, %36, %cst_27 {dimension_numbers = #tpu.dot_dimension_numbers<[1], [0], [0], [1], [0, 0, 1, 1], [], []>} : vector<8x3xf32>, vector<3x384xf32>, vector<8x384xf32> -> vector<8x384xf32>
    %40 = arith.addf %35, %39 : vector<8x384xf32>
    %c0_28 = arith.constant 0 : index
    %c20 = arith.constant 20 : index
    %41 = vector.load %arg8[%c0_28, %c20] : memref<3x422xf32, #tpu.memory_space<vmem>>, vector<3x384xf32>
    %42 = vector.extract_strided_slice %14 {offsets = [1, 2, 0, 0], sizes = [1, 1, 8, 3], strides = [1, 1, 1, 1]} : vector<3x3x8x3xf32> to vector<1x1x8x3xf32>
    %43 = vector.shape_cast %42 : vector<1x1x8x3xf32> to vector<8x3xf32>
    %cst_29 = arith.constant dense<0.000000e+00> : vector<8x384xf32>
    %44 = tpu.matmul %43, %41, %cst_29 {dimension_numbers = #tpu.dot_dimension_numbers<[1], [0], [0], [1], [0, 0, 1, 1], [], []>} : vector<8x3xf32>, vector<3x384xf32>, vector<8x384xf32> -> vector<8x384xf32>
    %45 = arith.addf %40, %44 : vector<8x384xf32>
    %c0_30 = arith.constant 0 : index
    %c36 = arith.constant 36 : index
    %46 = vector.load %arg8[%c0_30, %c36] : memref<3x422xf32, #tpu.memory_space<vmem>>, vector<3x384xf32>
    %47 = vector.extract_strided_slice %14 {offsets = [2, 0, 0, 0], sizes = [1, 1, 8, 3], strides = [1, 1, 1, 1]} : vector<3x3x8x3xf32> to vector<1x1x8x3xf32>
    %48 = vector.shape_cast %47 : vector<1x1x8x3xf32> to vector<8x3xf32>
    %cst_31 = arith.constant dense<0.000000e+00> : vector<8x384xf32>
    %49 = tpu.matmul %48, %46, %cst_31 {dimension_numbers = #tpu.dot_dimension_numbers<[1], [0], [0], [1], [0, 0, 1, 1], [], []>} : vector<8x3xf32>, vector<3x384xf32>, vector<8x384xf32> -> vector<8x384xf32>
    %50 = arith.addf %45, %49 : vector<8x384xf32>
    %c0_32 = arith.constant 0 : index
    %c37 = arith.constant 37 : index
    %51 = vector.load %arg8[%c0_32, %c37] : memref<3x422xf32, #tpu.memory_space<vmem>>, vector<3x384xf32>
    %52 = vector.extract_strided_slice %14 {offsets = [2, 1, 0, 0], sizes = [1, 1, 8, 3], strides = [1, 1, 1, 1]} : vector<3x3x8x3xf32> to vector<1x1x8x3xf32>
    %53 = vector.shape_cast %52 : vector<1x1x8x3xf32> to vector<8x3xf32>
    %cst_33 = arith.constant dense<0.000000e+00> : vector<8x384xf32>
    %54 = tpu.matmul %53, %51, %cst_33 {dimension_numbers = #tpu.dot_dimension_numbers<[1], [0], [0], [1], [0, 0, 1, 1], [], []>} : vector<8x3xf32>, vector<3x384xf32>, vector<8x384xf32> -> vector<8x384xf32>
    %55 = arith.addf %50, %54 : vector<8x384xf32>
    %c0_34 = arith.constant 0 : index
    %c38 = arith.constant 38 : index
    %56 = vector.load %arg8[%c0_34, %c38] : memref<3x422xf32, #tpu.memory_space<vmem>>, vector<3x384xf32>
    %57 = vector.extract_strided_slice %14 {offsets = [2, 2, 0, 0], sizes = [1, 1, 8, 3], strides = [1, 1, 1, 1]} : vector<3x3x8x3xf32> to vector<1x1x8x3xf32>
    %58 = vector.shape_cast %57 : vector<1x1x8x3xf32> to vector<8x3xf32>
    %cst_35 = arith.constant dense<0.000000e+00> : vector<8x384xf32>
    %59 = tpu.matmul %58, %56, %cst_35 {dimension_numbers = #tpu.dot_dimension_numbers<[1], [0], [0], [1], [0, 0, 1, 1], [], []>} : vector<8x3xf32>, vector<3x384xf32>, vector<8x384xf32> -> vector<8x384xf32>
    %60 = arith.addf %55, %59 : vector<8x384xf32>
    %c0_36 = arith.constant 0 : index
    %c0_37 = arith.constant 0 : index
    %61 = vector.load %arg6[%c0_36, %c0_37] : memref<8x1xf32, #tpu.memory_space<vmem>>, vector<8x1xf32>
    %62 = vector.broadcast %61 : vector<8x1xf32> to vector<8x384xf32>
    %63 = arith.addf %60, %62 : vector<8x384xf32>
    %64 = vector.broadcast %0 : vector<1x384xf32> to vector<8x384xf32>
    %65 = arith.mulf %64, %63 : vector<8x384xf32>
    %c0_38 = arith.constant 0 : index
    %c0_39 = arith.constant 0 : index
    %c0_40 = arith.constant 0 : index
    %66 = vector.load %arg7[%c0_38, %c0_39, %c0_40] : memref<1x8x384xf32, #tpu.memory_space<vmem>>, vector<1x8x384xf32>
    %67 = vector.shape_cast %66 : vector<1x8x384xf32> to vector<8x384xf32>
    %68 = vector.shape_cast %65 : vector<8x384xf32> to vector<1x8x384xf32>
    tpu.vector_store %arg7[%c0_38, %c0_39, %c0_40], %68 {strides = array<i32>} : memref<1x8x384xf32, #tpu.memory_space<vmem>>, vector<1x8x384xf32>,
    return
  }
  func.func @transform_0(%arg0: i32) -> (i32, i32, i32) {
    %c0_i32 = arith.constant 0 : i32
    %c0_i32_0 = arith.constant 0 : i32
    %c0_i32_1 = arith.constant 0 : i32
    return %arg0, %c0_i32, %c0_i32_0 : i32, i32, i32
  }
  func.func @transform_1(%arg0: i32) -> (i32, i32) {
    %c0_i32 = arith.constant 0 : i32
    %c0_i32_0 = arith.constant 0 : i32
    %c0_i32_1 = arith.constant 0 : i32
    return %c0_i32, %c0_i32_0 : i32, i32
  }
  func.func @transform_2(%arg0: i32) -> (i32, i32) {
    %c0_i32 = arith.constant 0 : i32
    %c0_i32_0 = arith.constant 0 : i32
    %c0_i32_1 = arith.constant 0 : i32
    return %c0_i32, %c0_i32_0 : i32, i32
  }
  func.func @transform_3(%arg0: i32) -> (i32, i32) {
    %c0_i32 = arith.constant 0 : i32
    %c0_i32_0 = arith.constant 0 : i32
    %c0_i32_1 = arith.constant 0 : i32
    return %c0_i32, %c0_i32_0 : i32, i32
  }
  func.func @transform_4(%arg0: i32) -> (i32, i32, i32, i32) {
    %c0_i32 = arith.constant 0 : i32
    %c0_i32_0 = arith.constant 0 : i32
    %c0_i32_1 = arith.constant 0 : i32
    %c0_i32_2 = arith.constant 0 : i32
    %c0_i32_3 = arith.constant 0 : i32
    return %c0_i32, %c0_i32_0, %c0_i32_1, %c0_i32_2 : i32, i32, i32, i32
  }
  func.func @transform_5(%arg0: i32) -> (i32, i32) {
    %c0_i32 = arith.constant 0 : i32
    %c0_i32_0 = arith.constant 0 : i32
    %c0_i32_1 = arith.constant 0 : i32
    return %c0_i32, %c0_i32_0 : i32, i32
  }
  func.func @transform_6(%arg0: i32) -> (i32, i32, i32) {
    %c0_i32 = arith.constant 0 : i32
    %c0_i32_0 = arith.constant 0 : i32
    %c0_i32_1 = arith.constant 0 : i32
    return %arg0, %c0_i32, %c0_i32_0 : i32, i32, i32
  }
}

</mosaic_0001>

<llo_original>
// kernel: tpu_custom_call.1
$region0: #{tpu_custom_call.1}
  #allocation0 [shape = 'u32[]', space=smem, size = 0x4, offset = 0x4, fixed_abs, tag = 'smem constant byte address 0x4 - core index']
  #allocation1 [shape = 'u32[144,128]{1,0:T(1,128)}', space=vmem, size = 0x12000, scoped, tag = 'internal scratch']
  #allocation2 [shape = 'f32[3,422]{1,0:T(4,128)}', space=vmem, size = 0x2000, scoped, tag = 'scratch operand']
  %s0 = inlined_call_operand.vmem [shape: f32[2,3,384], index: 0, kind: input, shape index: {}]
  %s1 = inlined_call_operand.vmem [shape: f32[3,1], index: 1, kind: input, shape index: {}]
  %s2 = inlined_call_operand.vmem [shape: f32[3,1], index: 2, kind: input, shape index: {}]
  %s3 = inlined_call_operand.vmem [shape: f32[1,384], index: 3, kind: input, shape index: {}]
  %s4 = inlined_call_operand.vmem [shape: f32[3,3,8,3], index: 4, kind: input, shape index: {}]
  %s5 = inlined_call_operand.vmem [shape: f32[8,1], index: 5, kind: input, shape index: {}]
  %s6 = inlined_call_operand.hbm [shape: f32[2,8,384], index: 6, kind: output, shape index: {}]
  %s7 = sld [smem:[#allocation0]]
  $region57: #{tpu_custom_call.1} parent=0
    _
  %s9 = ssub.s32 1, %s7
  %s10 = scalar_select 0, %s9, %s7
  $region1: #{tpu_custom_call.1} parent=0
    #allocation3 [shape = 'u8[24576]{0}', space=vmem, size = 0x6000, scoped, tag = 'output window, operand 0']
    #allocation4 [shape = 's32[2]{0}', space=sflag, size = 0x8, scoped, tag = 'scoped memory for tpu_custom_call.1']
    %11 = vsyncpa [#allocation4], 0
    %s12 = scalar_lea.sflag [#allocation4], 1
    %13 = vsyncpa %s12, 0
    loop: start=0, step=1, limit=4
    $region2: #{tpu_custom_call.1} parent=1 // loop_pre_header
      _
    $region3: #{tpu_custom_call.1} parent=1 // loop_header
      %s15 = sphi 0, %s19
      %p16 = scmp.ge.s32.totalorder %s15, 4
      %s25 = sphi 0, %s27
      %s28 = sphi 0, %s25
      %s29 = sphi 0, %s28
      %s45 = sphi 0, %s29
      %s49 = sphi 0, %s49
      %s51 = sphi 0, %s49
      %s52 = sphi 0, %s51
      %s66 = sphi 0, %s52
      %s70 = sphi 0, %s70
      %s72 = sphi 0, %s70
      %s73 = sphi 0, %s72
      %s87 = sphi 0, %s73
      %s91 = sphi 0, %s91
      %s93 = sphi 0, %s91
      %s94 = sphi 0, %s93
      %s108 = sphi 0, %s94
      %s112 = sphi 0, %s112
      %s114 = sphi 0, %s112
      %s115 = sphi 0, %s114
      %s129 = sphi 0, %s115
      %s133 = sphi 0, %s133
      %s135 = sphi 0, %s133
      %s136 = sphi 0, %s135
      %s150 = sphi 0, %s136
      %s156 = sphi 0, %s158
      %s159 = sphi 0, %s156
      %s160 = sphi 0, %s159
      %s176 = sphi 0, %s160
    $region4: #{tpu_custom_call.1} parent=1 // loop_header_branch
      %18 = sbr.rel (%p16) target = $region8
    $region5: #{tpu_custom_call.1} parent=1 // loop_body
      %s20 = ssub.s32 %s15, 1
      %s21 = ssub.s32 %s15, 2
      %s22 = sadd.s32 %s15, 1
      %s23 = ssub.s32 %s15, %s22
      %p24 = scmp.eq.s32.totalorder %s23, 0
      %s26 = sadd.s32 %s25, 1
      %s27 = scalar_select %p24, %s25, %s26
      %p30 = pneg %p24
      %p31 = scmp.eq.s32.totalorder %s15, 1
      %p32 = por %p30, %p31
      %p33 = scmp.ne.s32.totalorder %s25, %s28
      %p34 = scmp.eq.s32.totalorder %s15, 0
      %p35 = por %p33, %p34
      %p36 = scmp.ne.s32.totalorder %s25, %s28
      %p37 = scmp.eq.s32.totalorder %s20, 1
      %p38 = por %p36, %p37
      %p39 = scmp.ne.s32.totalorder %s28, %s29
      %p40 = scmp.eq.s32.totalorder %s20, 0
      %p41 = por %p39, %p40
      %p42 = scmp.ne.s32.totalorder %s28, %s29
      %p43 = scmp.eq.s32.totalorder %s21, 1
      %p44 = por %p42, %p43
      %p46 = scmp.ne.s32.totalorder %s29, %s45
      %p47 = scmp.eq.s32.totalorder %s21, 0
      %p48 = por %p46, %p47
      %s50 = sadd.s32 %s49, 1
      %p53 = scmp.eq.s32.totalorder %s15, 1
      %p54 = scmp.ne.s32.totalorder %s49, %s51
      %p55 = scmp.eq.s32.totalorder %s15, 0
      %p56 = por %p54, %p55
      %p57 = scmp.ne.s32.totalorder %s49, %s51
      %p58 = scmp.eq.s32.totalorder %s20, 1
      %p59 = por %p57, %p58
      %p60 = scmp.ne.s32.totalorder %s51, %s52
      %p61 = scmp.eq.s32.totalorder %s20, 0
      %p62 = por %p60, %p61
      %p63 = scmp.ne.s32.totalorder %s51, %s52
      %p64 = scmp.eq.s32.totalorder %s21, 1
      %p65 = por %p63, %p64
      %p67 = scmp.ne.s32.totalorder %s52, %s66
      %p68 = scmp.eq.s32.totalorder %s21, 0
      %p69 = por %p67, %p68
      %s71 = sadd.s32 %s70, 1
      %p74 = scmp.eq.s32.totalorder %s15, 1
      %p75 = scmp.ne.s32.totalorder %s70, %s72
      %p76 = scmp.eq.s32.totalorder %s15, 0
      %p77 = por %p75, %p76
      %p78 = scmp.ne.s32.totalorder %s70, %s72
      %p79 = scmp.eq.s32.totalorder %s20, 1
      %p80 = por %p78, %p79
      %p81 = scmp.ne.s32.totalorder %s72, %s73
      %p82 = scmp.eq.s32.totalorder %s20, 0
      %p83 = por %p81, %p82
      %p84 = scmp.ne.s32.totalorder %s72, %s73
      %p85 = scmp.eq.s32.totalorder %s21, 1
      %p86 = por %p84, %p85
      %p88 = scmp.ne.s32.totalorder %s73, %s87
      %p89 = scmp.eq.s32.totalorder %s21, 0
      %p90 = por %p88, %p89
      %s92 = sadd.s32 %s91, 1
      %p95 = scmp.eq.s32.totalorder %s15, 1
      %p96 = scmp.ne.s32.totalorder %s91, %s93
      %p97 = scmp.eq.s32.totalorder %s15, 0
      %p98 = por %p96, %p97
      %p99 = scmp.ne.s32.totalorder %s91, %s93
      %p100 = scmp.eq.s32.totalorder %s20, 1
      %p101 = por %p99, %p100
      %p102 = scmp.ne.s32.totalorder %s93, %s94
      %p103 = scmp.eq.s32.totalorder %s20, 0
      %p104 = por %p102, %p103
      %p105 = scmp.ne.s32.totalorder %s93, %s94
      %p106 = scmp.eq.s32.totalorder %s21, 1
      %p107 = por %p105, %p106
      %p109 = scmp.ne.s32.totalorder %s94, %s108
      %p110 = scmp.eq.s32.totalorder %s21, 0
      %p111 = por %p109, %p110
      %s113 = sadd.s32 %s112, 1
      %p116 = scmp.eq.s32.totalorder %s15, 1
      %p117 = scmp.ne.s32.totalorder %s112, %s114
      %p118 = scmp.eq.s32.totalorder %s15, 0
      %p119 = por %p117, %p118
      %p120 = scmp.ne.s32.totalorder %s112, %s114
      %p121 = scmp.eq.s32.totalorder %s20, 1
      %p122 = por %p120, %p121
      %p123 = scmp.ne.s32.totalorder %s114, %s115
      %p124 = scmp.eq.s32.totalorder %s20, 0
      %p125 = por %p123, %p124
      %p126 = scmp.ne.s32.totalorder %s114, %s115
      %p127 = scmp.eq.s32.totalorder %s21, 1
      %p128 = por %p126, %p127
      %p130 = scmp.ne.s32.totalorder %s115, %s129
      %p131 = scmp.eq.s32.totalorder %s21, 0
      %p132 = por %p130, %p131
      %s134 = sadd.s32 %s133, 1
      %p137 = scmp.eq.s32.totalorder %s15, 1
      %p138 = scmp.ne.s32.totalorder %s133, %s135
      %p139 = scmp.eq.s32.totalorder %s15, 0
      %p140 = por %p138, %p139
      %p141 = scmp.ne.s32.totalorder %s133, %s135
      %p142 = scmp.eq.s32.totalorder %s20, 1
      %p143 = por %p141, %p142
      %p144 = scmp.ne.s32.totalorder %s135, %s136
      %p145 = scmp.eq.s32.totalorder %s20, 0
      %p146 = por %p144, %p145
      %p147 = scmp.ne.s32.totalorder %s135, %s136
      %p148 = scmp.eq.s32.totalorder %s21, 1
      %p149 = por %p147, %p148
      %p151 = scmp.ne.s32.totalorder %s136, %s150
      %p152 = scmp.eq.s32.totalorder %s21, 0
      %p153 = por %p151, %p152
      %s154 = ssub.s32 %s15, %s22
      %p155 = scmp.eq.s32.totalorder %s154, 0
      %s157 = sadd.s32 %s156, 1
      %s158 = scalar_select %p155, %s156, %s157
      %p161 = pneg %p155
      %p162 = scmp.eq.s32.totalorder %s15, 1
      %p163 = por %p161, %p162
      %p164 = scmp.ne.s32.totalorder %s156, %s159
      %p165 = scmp.eq.s32.totalorder %s15, 0
      %p166 = por %p164, %p165
      %p167 = scmp.ne.s32.totalorder %s156, %s159
      %p168 = scmp.eq.s32.totalorder %s20, 1
      %p169 = por %p167, %p168
      %p170 = scmp.ne.s32.totalorder %s159, %s160
      %p171 = scmp.eq.s32.totalorder %s20, 0
      %p172 = por %p170, %p171
      %p173 = scmp.ne.s32.totalorder %s159, %s160
      %p174 = scmp.eq.s32.totalorder %s21, 1
      %p175 = por %p173, %p174
      %p177 = scmp.ne.s32.totalorder %s160, %s176
      %p178 = scmp.eq.s32.totalorder %s21, 0
      %p179 = por %p177, %p178
      %p180 = scmp.le.s32.totalorder 1, %s15
      %p181 = scmp.lt.s32.totalorder %s15, 3
      %p182 = pnand %p180, %p181
      %p183 = pneg %p182
      // Predicated region
      $region9: #{tpu_custom_call.1} parent=5 // pred_check
        _
      $region10: #{tpu_custom_call.1} parent=5 // pred_check_branch
        %185 = sbr.rel (%p182) target = $region12
      $region11: #{tpu_custom_call.1} parent=5 // pred_region
        %s186 = ssub.s32 %s15, 1
        // Predicated region
        $region13: #{tpu_custom_call.1} parent=11 // pred_check
          %p187 = pneg %p62
        $region14: #{tpu_custom_call.1} parent=11 // pred_check_branch
          %189 = sbr.rel (%p187) target = $region16
        $region15: #{tpu_custom_call.1} parent=11 // pred_region
          _
        $region16: #{tpu_custom_call.1} parent=11 // pred_fallthru
          _
        // Predicated region
        $region17: #{tpu_custom_call.1} parent=11 // pred_check
          %p190 = pneg %p83
        $region18: #{tpu_custom_call.1} parent=11 // pred_check_branch
          %192 = sbr.rel (%p190) target = $region20
        $region19: #{tpu_custom_call.1} parent=11 // pred_region
          _
        $region20: #{tpu_custom_call.1} parent=11 // pred_fallthru
          _
        // Predicated region
        $region21: #{tpu_custom_call.1} parent=11 // pred_check
          %p193 = pneg %p104
        $region22: #{tpu_custom_call.1} parent=11 // pred_check_branch
          %195 = sbr.rel (%p193) target = $region24
        $region23: #{tpu_custom_call.1} parent=11 // pred_region
          _
        $region24: #{tpu_custom_call.1} parent=11 // pred_fallthru
          _
        // Predicated region
        $region25: #{tpu_custom_call.1} parent=11 // pred_check
          %p196 = pneg %p125
        $region26: #{tpu_custom_call.1} parent=11 // pred_check_branch
          %198 = sbr.rel (%p196) target = $region28
        $region27: #{tpu_custom_call.1} parent=11 // pred_region
          _
        $region28: #{tpu_custom_call.1} parent=11 // pred_fallthru
          _
        // Predicated region
        $region29: #{tpu_custom_call.1} parent=11 // pred_check
          %p199 = pneg %p146
        $region30: #{tpu_custom_call.1} parent=11 // pred_check_branch
          %201 = sbr.rel (%p199) target = $region32
        $region31: #{tpu_custom_call.1} parent=11 // pred_region
          _
        $region32: #{tpu_custom_call.1} parent=11 // pred_fallthru
          _
      $region12: #{tpu_custom_call.1} parent=5 // pred_fallthru
        _
      %p202 = scmp.lt.s32.totalorder %s15, 2
      // Predicated region
      $region33: #{tpu_custom_call.1} parent=5 // pred_check
        %p203 = pneg %p202
      $region34: #{tpu_custom_call.1} parent=5 // pred_check_branch
        %205 = sbr.rel (%p203) target = $region36
      $region35: #{tpu_custom_call.1} parent=5 // pred_region
        // Predicated region
        $region37: #{tpu_custom_call.1} parent=35 // pred_check
          %p206 = pneg %p35
        $region38: #{tpu_custom_call.1} parent=35 // pred_check_branch
          %208 = sbr.rel (%p206) target = $region40
        $region39: #{tpu_custom_call.1} parent=35 // pred_region
          %p209 = scmp.lt.s32.totalorder %s15, 1
          %s210 = scalar_select %p209, %s15, 1
          %s211 = smul.addr %s210, 3
          %s212 = smul.addr %s211, 4
          %s213 = scalar_lea.vmem %s0, %s212
        $region40: #{tpu_custom_call.1} parent=35 // pred_fallthru
          _
      $region36: #{tpu_custom_call.1} parent=5 // pred_fallthru
        _
      %p214 = scmp.le.s32.totalorder 1, %s15
      %p215 = scmp.lt.s32.totalorder %s15, 3
      %p216 = pnand %p214, %p215
      %p217 = pneg %p216
      // Predicated region
      $region41: #{tpu_custom_call.1} parent=5 // pred_check
        _
      $region42: #{tpu_custom_call.1} parent=5 // pred_check_branch
        %219 = sbr.rel (%p216) target = $region44
      $region43: #{tpu_custom_call.1} parent=5 // pred_region
        %s220 = ssub.s32 %s15, 1
        %p221 = scmp.lt.s32.totalorder %s20, 1
        %s222 = scalar_select %p221, %s20, 1
        %s223 = smul.addr %s222, 3
        %s224 = smul.addr %s223, 4
        %s225 = scalar_lea.vmem %s0, %s224
        %p226 = pneg %p41
        %p227 = pneg %p38
        %p228 = pneg %p62
        %p229 = pneg %p59
        %p230 = pneg %p83
        %p231 = pneg %p80
        %p232 = pneg %p104
        %p233 = pneg %p101
        %p234 = pneg %p125
        %p235 = pneg %p122
        %p236 = pneg %p146
        %p237 = pneg %p143
        %p238 = pneg %p172
        %p239 = pneg %p169
        %s240 = sand.u32 %s159, 1
        %s241 = scalar_lea.sflag [#allocation4], %s240
        %s242 = sand.u32 %s159, 1
        %s243 = smul.addr %s242, 24
        %s244 = scalar_lea.vmem [#allocation3], %s243
        %p245 = scmp.lt.s32.totalorder %s20, 1
        %s246 = scalar_select %p245, %s20, 1
        %s247 = smul.addr %s246, 3
        %s248 = smul.addr %s247, 4
        %s249 = scalar_lea.vmem %s0, %s248
        %v250 = vld [vmem:[%s3] sm:$0x7]
        %v251 = vld [vmem:[%s249] sm:$0x77]
        %v252 = vld [vmem:[%s249 + $0x8] sm:$0x7]
        %v253 = vld [vmem:[%s1] sm:$0x7]
        %255 = vset.pattern.permute.xlu0 0
        %256 = vperm.xlu0 %255, %v253
        %v257 = vpop.permute.xlu0 %256
        %v259 = vunpack.c.l.s4 839922192
        %v260 = vunpack.c.0.s8 %v259
        %v261 = vlaneseq
        %v262 = vshrl.u32 %v261, 7
        %v263 = vsub.s32 %v260, %v262
        %v264 = vrot.slane %v257, %v263
        %v266 = vmul.f32 %v251, %v264
        %v267 = vmul.f32 %v252, %v264
        %v268 = vld [vmem:[%s2] sm:$0x7]
        %270 = vset.pattern.permute.xlu0 0
        %271 = vperm.xlu0 %270, %v268
        %v272 = vpop.permute.xlu0 %271
        %v274 = vunpack.c.l.s4 839922192
        %v275 = vunpack.c.0.s8 %v274
        %v276 = vlaneseq
        %v277 = vshrl.u32 %v276, 7
        %v278 = vsub.s32 %v275, %v277
        %v279 = vrot.slane %v272, %v278
        %v281 = vadd.f32 %v266, %v279
        %v282 = vadd.f32 %v267, %v279
        %v284 = vlaneseq
        %v285 = vshrl.u32 %v284, 7
        %v286 = vsub.s32 0, %v285
        %v287 = vrot.slane %v250, %v286
        %v288 = vlaneseq
        %v289 = vshrl.u32 %v288, 7
        %v290 = vsub.s32 1, %v289
        %v291 = vrot.slane %v250, %v290
        %v292 = vlaneseq
        %v293 = vshrl.u32 %v292, 7
        %v294 = vsub.s32 2, %v293
        %v295 = vrot.slane %v250, %v294
        %v297 = vcombine.low %v287, %v291
        %v299 = vmul.f32 %v281, %v297
        %v300 = vmul.f32 %v282, %v295
        %301 = vst [vmem:[#allocation2] sm:$0x77] 0.0
        %vm302 = vcmask 1042432
        %vm303 = vcmask 309252
        %vm304 = vmor %vm303, %vm302
        %305 = vst.msk [vmem:[#allocation2 + $0x8] sm:$0x77] %vm304, 0.0
        %308 = vrot.lane.b32.xlu0 %v299, 19
        %v309 = vpop.permute.xlu0 %308
        %310 = vrot.lane.b32.xlu0 %v300, 19
        %v311 = vpop.permute.xlu0 %310
        %v312 = vrot.slane %v309, 4
        %v313 = vrot.slane %v311, 4
        %vm314 = vcmask 154624
        %v315 = vsel %vm314, %v312, %v309
        %vm316 = vcmask 1043456
        %v317 = vsel %vm316, %v312, %v313
        %v318 = vsel %vm314, %v317, %v311
        %vm321 = vcmask 1042584
        %vm322 = vcmask 1046532
        %vm323 = vmor %vm322, %vm321
        %324 = vst.msk [vmem:[#allocation2] sm:$0x77] %vm323, %v315
        %vm325 = vcmask 153604
        %vm326 = vmor %vm325, %vm302
        %327 = vst.msk [vmem:[#allocation2 + $0x8] sm:$0x77] %vm326, %v318
        %v328 = vld [vmem:[%s4] sm:$0xff]
        %v329 = vld [vmem:[%s4 + $0x8] sm:$0xff]
        %v330 = vld [vmem:[%s4 + $0x10] sm:$0xff]
        %v331 = vld [vmem:[%s4 + $0x18] sm:$0xff]
        %v332 = vld [vmem:[%s4 + $0x20] sm:$0xff]
        %v333 = vld [vmem:[%s4 + $0x28] sm:$0xff]
        %v334 = vld [vmem:[%s4 + $0x30] sm:$0xff]
        %v335 = vld [vmem:[%s4 + $0x38] sm:$0xff]
        %v336 = vld [vmem:[%s4 + $0x40] sm:$0xff]
        %v337 = vld [vmem:[#allocation2] sm:$0x77]
        %v338 = vld [vmem:[#allocation2 + $0x8] sm:$0x7]
        %v339 = vld [vmem:[#allocation2 + $0x8] sm:$0x77]
        %v342 = vcombine.high %v337, %v337
        %v343 = vcombine.high %v339, %v339
        %344 = vrot.lane.b32.xlu0 %v337, 127
        %v345 = vpop.permute.xlu0 %344
        %346 = vrot.lane.b32.xlu0 %v342, 127
        %v347 = vpop.permute.xlu0 %346
        %348 = vrot.lane.b32.xlu0 %v339, 127
        %v349 = vpop.permute.xlu0 %348
        %350 = vrot.lane.b32.xlu0 %v343, 127
        %v351 = vpop.permute.xlu0 %350
        %vm352 = vcmask 1039360
        %v353 = vsel %vm352, %v345, %v347
        %v354 = vsel %vm352, %v347, %v349
        %v355 = vsel %vm352, %v349, %v351
        %vm356 = vcmask 23552
        %v358 = vsel %vm356, %v329, 0
        %v360 = vsel %vm302, %v353, 0
        %v362 = vsel %vm302, %v354, 0
        %v364 = vsel %vm302, %v355, 0
        %366 = vmatprep.subr.mxu0 0.0
        %367 = vmatpush1.msra.mxu0 0.0
        %368 = vmatprep.subr.mxu0 0.0
        %369 = vmatpush1.msra.mxu0 0.0
        %370 = vmatprep.subr.mxu0 0.0
        %371 = vmatpush1.msra.mxu0 0.0
        %372 = vmatprep.subr.mxu0 0.0
        %373 = vmatpush1.msra.mxu0 0.0
        %374 = vmatprep.subr.mxu0 0.0
        %375 = vmatpush1.msra.mxu0 0.0
        %376 = vmatprep.subr.mxu0 0.0
        %377 = vmatpush1.msra.mxu0 0.0
        %378 = vmatprep.subr.mxu0 0.0
        %379 = vmatpush1.msra.mxu0 0.0
        %380 = vmatprep.subr.mxu0 0.0
        %381 = vmatpush1.msra.mxu0 0.0
        %382 = vmatprep.subr.mxu0 0.0
        %383 = vmatpush1.msra.mxu0 0.0
        %384 = vmatprep.subr.mxu0 0.0
        %385 = vmatpush1.msra.mxu0 0.0
        %386 = vmatprep.subr.mxu0 0.0
        %387 = vmatpush1.msra.mxu0 0.0
        %388 = vmatprep.subr.mxu0 0.0
        %389 = vmatpush1.msra.mxu0 0.0
        %390 = vmatprep.subr.mxu0 0.0
        %391 = vmatpush1.msra.mxu0 0.0
        %392 = vmatprep.subr.mxu0 0.0
        %393 = vmatpush1.msra.mxu0 0.0
        %394 = vmatprep.subr.mxu0 0.0
        %395 = vmatpush1.msra.mxu0 0.0
        %396 = vmatprep.subr.mxu0 %v362
        %397 = vmatpush1.msra.mxu0 %v360
        %398 = vmatprep.subr.mxu0 0.0
        %399 = vmatpush2.msra.mxu0 0.0
        %400 = vmatprep.subr.mxu0 0.0
        %401 = vmatpush2.msra.mxu0 0.0
        %402 = vmatprep.subr.mxu0 0.0
        %403 = vmatpush2.msra.mxu0 0.0
        %404 = vmatprep.subr.mxu0 0.0
        %405 = vmatpush2.msra.mxu0 0.0
        %406 = vmatprep.subr.mxu0 0.0
        %407 = vmatpush2.msra.mxu0 0.0
        %408 = vmatprep.subr.mxu0 0.0
        %409 = vmatpush2.msra.mxu0 0.0
        %410 = vmatprep.subr.mxu0 0.0
        %411 = vmatpush2.msra.mxu0 0.0
        %412 = vmatprep.subr.mxu0 0.0
        %413 = vmatpush2.msra.mxu0 0.0
        %414 = vmatprep.subr.mxu0 0.0
        %415 = vmatpush2.msra.mxu0 0.0
        %416 = vmatprep.subr.mxu0 0.0
        %417 = vmatpush2.msra.mxu0 0.0
        %418 = vmatprep.subr.mxu0 0.0
        %419 = vmatpush2.msra.mxu0 0.0
        %420 = vmatprep.subr.mxu0 0.0
        %421 = vmatpush2.msra.mxu0 0.0
        %422 = vmatprep.subr.mxu0 0.0
        %423 = vmatpush2.msra.mxu0 0.0
        %424 = vmatprep.subr.mxu0 0.0
        %425 = vmatpush2.msra.mxu0 0.0
        %426 = vmatprep.subr.mxu0 0.0
        %427 = vmatpush2.msra.mxu0 0.0
        %428 = vmatprep.subr.mxu0 0.0
        %429 = vmatpush2.msra.mxu0 0.0
        %430 = vmatprep.mubr.f32.mxu0 0.0
        %431 = vmatmul.mubr.f32.gmra.mxu0 %v358
        %v432 = vpop.f32.mrf.mxu0
        %v433 = vadd.f32 0.0, %v432
        %v434 = vpop.f32.mrf.mxu0
        %v435 = vadd.f32 0.0, %v434
        %436 = vdwg.mxu0
        %437 = vmatprep.subr.mxu0 0.0
        %438 = vmatpush1.msra.mxu0 0.0
        %439 = vmatprep.subr.mxu0 0.0
        %440 = vmatpush1.msra.mxu0 0.0
        %441 = vmatprep.subr.mxu0 0.0
        %442 = vmatpush1.msra.mxu0 0.0
        %443 = vmatprep.subr.mxu0 0.0
        %444 = vmatpush1.msra.mxu0 0.0
        %445 = vmatprep.subr.mxu0 0.0
        %446 = vmatpush1.msra.mxu0 0.0
        %447 = vmatprep.subr.mxu0 0.0
        %448 = vmatpush1.msra.mxu0 0.0
        %449 = vmatprep.subr.mxu0 0.0
        %450 = vmatpush1.msra.mxu0 0.0
        %451 = vmatprep.subr.mxu0 0.0
        %452 = vmatpush1.msra.mxu0 0.0
        %453 = vmatprep.subr.mxu0 0.0
        %454 = vmatpush1.msra.mxu0 0.0
        %455 = vmatprep.subr.mxu0 0.0
        %456 = vmatpush1.msra.mxu0 0.0
        %457 = vmatprep.subr.mxu0 0.0
        %458 = vmatpush1.msra.mxu0 0.0
        %459 = vmatprep.subr.mxu0 0.0
        %460 = vmatpush1.msra.mxu0 0.0
        %461 = vmatprep.subr.mxu0 0.0
        %462 = vmatpush1.msra.mxu0 0.0
        %463 = vmatprep.subr.mxu0 0.0
        %464 = vmatpush1.msra.mxu0 0.0
        %465 = vmatprep.subr.mxu0 0.0
        %466 = vmatpush1.msra.mxu0 0.0
        %467 = vmatprep.subr.mxu0 0.0
        %468 = vmatpush1.msra.mxu0 %v364
        %469 = vmatprep.subr.mxu0 0.0
        %470 = vmatpush2.msra.mxu0 0.0
        %471 = vmatprep.subr.mxu0 0.0
        %472 = vmatpush2.msra.mxu0 0.0
        %473 = vmatprep.subr.mxu0 0.0
        %474 = vmatpush2.msra.mxu0 0.0
        %475 = vmatprep.subr.mxu0 0.0
        %476 = vmatpush2.msra.mxu0 0.0
        %477 = vmatprep.subr.mxu0 0.0
        %478 = vmatpush2.msra.mxu0 0.0
        %479 = vmatprep.subr.mxu0 0.0
        %480 = vmatpush2.msra.mxu0 0.0
        %481 = vmatprep.subr.mxu0 0.0
        %482 = vmatpush2.msra.mxu0 0.0
        %483 = vmatprep.subr.mxu0 0.0
        %484 = vmatpush2.msra.mxu0 0.0
        %485 = vmatprep.subr.mxu0 0.0
        %486 = vmatpush2.msra.mxu0 0.0
        %487 = vmatprep.subr.mxu0 0.0
        %488 = vmatpush2.msra.mxu0 0.0
        %489 = vmatprep.subr.mxu0 0.0
        %490 = vmatpush2.msra.mxu0 0.0
        %491 = vmatprep.subr.mxu0 0.0
        %492 = vmatpush2.msra.mxu0 0.0
        %493 = vmatprep.subr.mxu0 0.0
        %494 = vmatpush2.msra.mxu0 0.0
        %495 = vmatprep.subr.mxu0 0.0
        %496 = vmatpush2.msra.mxu0 0.0
        %497 = vmatprep.subr.mxu0 0.0
        %498 = vmatpush2.msra.mxu0 0.0
        %499 = vmatprep.subr.mxu0 0.0
        %500 = vmatpush2.msra.mxu0 0.0
        %501 = vmatprep.mubr.f32.mxu0 0.0
        %502 = vmatmul.mubr.f32.gmra.mxu0 %v358
        %v503 = vpop.f32.mrf.mxu0
        %v504 = vadd.f32 0.0, %v503
        %v505 = vpop.f32.mrf.mxu0
        %506 = vdwg.mxu0
        %v509 = vsel %vm356, %v328, 0
        %v511 = vsel %vm302, %v337, 0
        %v513 = vsel %vm302, %v342, 0
        %v515 = vsel %vm302, %v338, 0
        %517 = vmatprep.subr.mxu0 0.0
        %518 = vmatpush1.msra.mxu0 0.0
        %519 = vmatprep.subr.mxu0 0.0
        %520 = vmatpush1.msra.mxu0 0.0
        %521 = vmatprep.subr.mxu0 0.0
        %522 = vmatpush1.msra.mxu0 0.0
        %523 = vmatprep.subr.mxu0 0.0
        %524 = vmatpush1.msra.mxu0 0.0
        %525 = vmatprep.subr.mxu0 0.0
        %526 = vmatpush1.msra.mxu0 0.0
        %527 = vmatprep.subr.mxu0 0.0
        %528 = vmatpush1.msra.mxu0 0.0
        %529 = vmatprep.subr.mxu0 0.0
        %530 = vmatpush1.msra.mxu0 0.0
        %531 = vmatprep.subr.mxu0 0.0
        %532 = vmatpush1.msra.mxu0 0.0
        %533 = vmatprep.subr.mxu0 0.0
        %534 = vmatpush1.msra.mxu0 0.0
        %535 = vmatprep.subr.mxu0 0.0
        %536 = vmatpush1.msra.mxu0 0.0
        %537 = vmatprep.subr.mxu0 0.0
        %538 = vmatpush1.msra.mxu0 0.0
        %539 = vmatprep.subr.mxu0 0.0
        %540 = vmatpush1.msra.mxu0 0.0
        %541 = vmatprep.subr.mxu0 0.0
        %542 = vmatpush1.msra.mxu0 0.0
        %543 = vmatprep.subr.mxu0 0.0
        %544 = vmatpush1.msra.mxu0 0.0
        %545 = vmatprep.subr.mxu0 0.0
        %546 = vmatpush1.msra.mxu0 0.0
        %547 = vmatprep.subr.mxu0 %v513
        %548 = vmatpush1.msra.mxu0 %v511
        %549 = vmatprep.subr.mxu0 0.0
        %550 = vmatpush2.msra.mxu0 0.0
        %551 = vmatprep.subr.mxu0 0.0
        %552 = vmatpush2.msra.mxu0 0.0
        %553 = vmatprep.subr.mxu0 0.0
        %554 = vmatpush2.msra.mxu0 0.0
        %555 = vmatprep.subr.mxu0 0.0
        %556 = vmatpush2.msra.mxu0 0.0
        %557 = vmatprep.subr.mxu0 0.0
        %558 = vmatpush2.msra.mxu0 0.0
        %559 = vmatprep.subr.mxu0 0.0
        %560 = vmatpush2.msra.mxu0 0.0
        %561 = vmatprep.subr.mxu0 0.0
        %562 = vmatpush2.msra.mxu0 0.0
        %563 = vmatprep.subr.mxu0 0.0
        %564 = vmatpush2.msra.mxu0 0.0
        %565 = vmatprep.subr.mxu0 0.0
        %566 = vmatpush2.msra.mxu0 0.0
        %567 = vmatprep.subr.mxu0 0.0
        %568 = vmatpush2.msra.mxu0 0.0
        %569 = vmatprep.subr.mxu0 0.0
        %570 = vmatpush2.msra.mxu0 0.0
        %571 = vmatprep.subr.mxu0 0.0
        %572 = vmatpush2.msra.mxu0 0.0
        %573 = vmatprep.subr.mxu0 0.0
        %574 = vmatpush2.msra.mxu0 0.0
        %575 = vmatprep.subr.mxu0 0.0
        %576 = vmatpush2.msra.mxu0 0.0
        %577 = vmatprep.subr.mxu0 0.0
        %578 = vmatpush2.msra.mxu0 0.0
        %579 = vmatprep.subr.mxu0 0.0
        %580 = vmatpush2.msra.mxu0 0.0
        %581 = vmatprep.mubr.f32.mxu0 0.0
        %582 = vmatmul.mubr.f32.gmra.mxu0 %v509
        %v583 = vpop.f32.mrf.mxu0
        %v584 = vadd.f32 %v433, %v583
        %v585 = vpop.f32.mrf.mxu0
        %v586 = vadd.f32 %v435, %v585
        %587 = vdwg.mxu0
        %588 = vmatprep.subr.mxu0 0.0
        %589 = vmatpush1.msra.mxu0 0.0
        %590 = vmatprep.subr.mxu0 0.0
        %591 = vmatpush1.msra.mxu0 0.0
        %592 = vmatprep.subr.mxu0 0.0
        %593 = vmatpush1.msra.mxu0 0.0
        %594 = vmatprep.subr.mxu0 0.0
        %595 = vmatpush1.msra.mxu0 0.0
        %596 = vmatprep.subr.mxu0 0.0
        %597 = vmatpush1.msra.mxu0 0.0
        %598 = vmatprep.subr.mxu0 0.0
        %599 = vmatpush1.msra.mxu0 0.0
        %600 = vmatprep.subr.mxu0 0.0
        %601 = vmatpush1.msra.mxu0 0.0
        %602 = vmatprep.subr.mxu0 0.0
        %603 = vmatpush1.msra.mxu0 0.0
        %604 = vmatprep.subr.mxu0 0.0
        %605 = vmatpush1.msra.mxu0 0.0
        %606 = vmatprep.subr.mxu0 0.0
        %607 = vmatpush1.msra.mxu0 0.0
        %608 = vmatprep.subr.mxu0 0.0
        %609 = vmatpush1.msra.mxu0 0.0
        %610 = vmatprep.subr.mxu0 0.0
        %611 = vmatpush1.msra.mxu0 0.0
        %612 = vmatprep.subr.mxu0 0.0
        %613 = vmatpush1.msra.mxu0 0.0
        %614 = vmatprep.subr.mxu0 0.0
        %615 = vmatpush1.msra.mxu0 0.0
        %616 = vmatprep.subr.mxu0 0.0
        %617 = vmatpush1.msra.mxu0 0.0
        %618 = vmatprep.subr.mxu0 0.0
        %619 = vmatpush1.msra.mxu0 %v515
        %620 = vmatprep.subr.mxu0 0.0
        %621 = vmatpush2.msra.mxu0 0.0
        %622 = vmatprep.subr.mxu0 0.0
        %623 = vmatpush2.msra.mxu0 0.0
        %624 = vmatprep.subr.mxu0 0.0
        %625 = vmatpush2.msra.mxu0 0.0
        %626 = vmatprep.subr.mxu0 0.0
        %627 = vmatpush2.msra.mxu0 0.0
        %628 = vmatprep.subr.mxu0 0.0
        %629 = vmatpush2.msra.mxu0 0.0
        %630 = vmatprep.subr.mxu0 0.0
        %631 = vmatpush2.msra.mxu0 0.0
        %632 = vmatprep.subr.mxu0 0.0
        %633 = vmatpush2.msra.mxu0 0.0
        %634 = vmatprep.subr.mxu0 0.0
        %635 = vmatpush2.msra.mxu0 0.0
        %636 = vmatprep.subr.mxu0 0.0
        %637 = vmatpush2.msra.mxu0 0.0
        %638 = vmatprep.subr.mxu0 0.0
        %639 = vmatpush2.msra.mxu0 0.0
        %640 = vmatprep.subr.mxu0 0.0
        %641 = vmatpush2.msra.mxu0 0.0
        %642 = vmatprep.subr.mxu0 0.0
        %643 = vmatpush2.msra.mxu0 0.0
        %644 = vmatprep.subr.mxu0 0.0
        %645 = vmatpush2.msra.mxu0 0.0
        %646 = vmatprep.subr.mxu0 0.0
        %647 = vmatpush2.msra.mxu0 0.0
        %648 = vmatprep.subr.mxu0 0.0
        %649 = vmatpush2.msra.mxu0 0.0
        %650 = vmatprep.subr.mxu0 0.0
        %651 = vmatpush2.msra.mxu0 0.0
        %652 = vmatprep.mubr.f32.mxu0 0.0
        %653 = vmatmul.mubr.f32.gmra.mxu0 %v509
        %v654 = vpop.f32.mrf.mxu0
        %v655 = vadd.f32 %v504, %v654
        %v656 = vpop.f32.mrf.mxu0
        %657 = vdwg.mxu0
        %v658 = vld [vmem:[#allocation2] sm:$0x77]
        %v659 = vld [vmem:[#allocation2 + $0x8] sm:$0x77]
        %v662 = vcombine.high %v658, %v658
        %v663 = vcombine.high %v659, %v659
        %664 = vrot.lane.b32.xlu0 %v658, 126
        %v665 = vpop.permute.xlu0 %664
        %666 = vrot.lane.b32.xlu0 %v662, 126
        %v667 = vpop.permute.xlu0 %666
        %668 = vrot.lane.b32.xlu0 %v659, 126
        %v669 = vpop.permute.xlu0 %668
        %670 = vrot.lane.b32.xlu0 %v663, 126
        %v671 = vpop.permute.xlu0 %670
        %vm672 = vcmask 1031168
        %v673 = vsel %vm672, %v665, %v667
        %v674 = vsel %vm672, %v667, %v669
        %v675 = vsel %vm672, %v669, %v671
        %v677 = vsel %vm356, %v330, 0
        %v679 = vsel %vm302, %v673, 0
        %v681 = vsel %vm302, %v674, 0
        %v683 = vsel %vm302, %v675, 0
        %685 = vmatprep.subr.mxu0 0.0
        %686 = vmatpush1.msra.mxu0 0.0
        %687 = vmatprep.subr.mxu0 0.0
        %688 = vmatpush1.msra.mxu0 0.0
        %689 = vmatprep.subr.mxu0 0.0
        %690 = vmatpush1.msra.mxu0 0.0
        %691 = vmatprep.subr.mxu0 0.0
        %692 = vmatpush1.msra.mxu0 0.0
        %693 = vmatprep.subr.mxu0 0.0
        %694 = vmatpush1.msra.mxu0 0.0
        %695 = vmatprep.subr.mxu0 0.0
        %696 = vmatpush1.msra.mxu0 0.0
        %697 = vmatprep.subr.mxu0 0.0
        %698 = vmatpush1.msra.mxu0 0.0
        %699 = vmatprep.subr.mxu0 0.0
        %700 = vmatpush1.msra.mxu0 0.0
        %701 = vmatprep.subr.mxu0 0.0
        %702 = vmatpush1.msra.mxu0 0.0
        %703 = vmatprep.subr.mxu0 0.0
        %704 = vmatpush1.msra.mxu0 0.0
        %705 = vmatprep.subr.mxu0 0.0
        %706 = vmatpush1.msra.mxu0 0.0
        %707 = vmatprep.subr.mxu0 0.0
        %708 = vmatpush1.msra.mxu0 0.0
        %709 = vmatprep.subr.mxu0 0.0
        %710 = vmatpush1.msra.mxu0 0.0
        %711 = vmatprep.subr.mxu0 0.0
        %712 = vmatpush1.msra.mxu0 0.0
        %713 = vmatprep.subr.mxu0 0.0
        %714 = vmatpush1.msra.mxu0 0.0
        %715 = vmatprep.subr.mxu0 %v681
        %716 = vmatpush1.msra.mxu0 %v679
        %717 = vmatprep.subr.mxu0 0.0
        %718 = vmatpush2.msra.mxu0 0.0
        %719 = vmatprep.subr.mxu0 0.0
        %720 = vmatpush2.msra.mxu0 0.0
        %721 = vmatprep.subr.mxu0 0.0
        %722 = vmatpush2.msra.mxu0 0.0
        %723 = vmatprep.subr.mxu0 0.0
        %724 = vmatpush2.msra.mxu0 0.0
        %725 = vmatprep.subr.mxu0 0.0
        %726 = vmatpush2.msra.mxu0 0.0
        %727 = vmatprep.subr.mxu0 0.0
        %728 = vmatpush2.msra.mxu0 0.0
        %729 = vmatprep.subr.mxu0 0.0
        %730 = vmatpush2.msra.mxu0 0.0
        %731 = vmatprep.subr.mxu0 0.0
        %732 = vmatpush2.msra.mxu0 0.0
        %733 = vmatprep.subr.mxu0 0.0
        %734 = vmatpush2.msra.mxu0 0.0
        %735 = vmatprep.subr.mxu0 0.0
        %736 = vmatpush2.msra.mxu0 0.0
        %737 = vmatprep.subr.mxu0 0.0
        %738 = vmatpush2.msra.mxu0 0.0
        %739 = vmatprep.subr.mxu0 0.0
        %740 = vmatpush2.msra.mxu0 0.0
        %741 = vmatprep.subr.mxu0 0.0
        %742 = vmatpush2.msra.mxu0 0.0
        %743 = vmatprep.subr.mxu0 0.0
        %744 = vmatpush2.msra.mxu0 0.0
        %745 = vmatprep.subr.mxu0 0.0
        %746 = vmatpush2.msra.mxu0 0.0
        %747 = vmatprep.subr.mxu0 0.0
        %748 = vmatpush2.msra.mxu0 0.0
        %749 = vmatprep.mubr.f32.mxu0 0.0
        %750 = vmatmul.mubr.f32.gmra.mxu0 %v677
        %v751 = vpop.f32.mrf.mxu0
        %v752 = vadd.f32 0.0, %v751
        %v753 = vpop.f32.mrf.mxu0
        %v754 = vadd.f32 0.0, %v753
        %755 = vdwg.mxu0
        %756 = vmatprep.subr.mxu0 0.0
        %757 = vmatpush1.msra.mxu0 0.0
        %758 = vmatprep.subr.mxu0 0.0
        %759 = vmatpush1.msra.mxu0 0.0
        %760 = vmatprep.subr.mxu0 0.0
        %761 = vmatpush1.msra.mxu0 0.0
        %762 = vmatprep.subr.mxu0 0.0
        %763 = vmatpush1.msra.mxu0 0.0
        %764 = vmatprep.subr.mxu0 0.0
        %765 = vmatpush1.msra.mxu0 0.0
        %766 = vmatprep.subr.mxu0 0.0
        %767 = vmatpush1.msra.mxu0 0.0
        %768 = vmatprep.subr.mxu0 0.0
        %769 = vmatpush1.msra.mxu0 0.0
        %770 = vmatprep.subr.mxu0 0.0
        %771 = vmatpush1.msra.mxu0 0.0
        %772 = vmatprep.subr.mxu0 0.0
        %773 = vmatpush1.msra.mxu0 0.0
        %774 = vmatprep.subr.mxu0 0.0
        %775 = vmatpush1.msra.mxu0 0.0
        %776 = vmatprep.subr.mxu0 0.0
        %777 = vmatpush1.msra.mxu0 0.0
        %778 = vmatprep.subr.mxu0 0.0
        %779 = vmatpush1.msra.mxu0 0.0
        %780 = vmatprep.subr.mxu0 0.0
        %781 = vmatpush1.msra.mxu0 0.0
        %782 = vmatprep.subr.mxu0 0.0
        %783 = vmatpush1.msra.mxu0 0.0
        %784 = vmatprep.subr.mxu0 0.0
        %785 = vmatpush1.msra.mxu0 0.0
        %786 = vmatprep.subr.mxu0 0.0
        %787 = vmatpush1.msra.mxu0 %v683
        %788 = vmatprep.subr.mxu0 0.0
        %789 = vmatpush2.msra.mxu0 0.0
        %790 = vmatprep.subr.mxu0 0.0
        %791 = vmatpush2.msra.mxu0 0.0
        %792 = vmatprep.subr.mxu0 0.0
        %793 = vmatpush2.msra.mxu0 0.0
        %794 = vmatprep.subr.mxu0 0.0
        %795 = vmatpush2.msra.mxu0 0.0
        %796 = vmatprep.subr.mxu0 0.0
        %797 = vmatpush2.msra.mxu0 0.0
        %798 = vmatprep.subr.mxu0 0.0
        %799 = vmatpush2.msra.mxu0 0.0
        %800 = vmatprep.subr.mxu0 0.0
        %801 = vmatpush2.msra.mxu0 0.0
        %802 = vmatprep.subr.mxu0 0.0
        %803 = vmatpush2.msra.mxu0 0.0
        %804 = vmatprep.subr.mxu0 0.0
        %805 = vmatpush2.msra.mxu0 0.0
        %806 = vmatprep.subr.mxu0 0.0
        %807 = vmatpush2.msra.mxu0 0.0
        %808 = vmatprep.subr.mxu0 0.0
        %809 = vmatpush2.msra.mxu0 0.0
        %810 = vmatprep.subr.mxu0 0.0
        %811 = vmatpush2.msra.mxu0 0.0
        %812 = vmatprep.subr.mxu0 0.0
        %813 = vmatpush2.msra.mxu0 0.0
        %814 = vmatprep.subr.mxu0 0.0
        %815 = vmatpush2.msra.mxu0 0.0
        %816 = vmatprep.subr.mxu0 0.0
        %817 = vmatpush2.msra.mxu0 0.0
        %818 = vmatprep.subr.mxu0 0.0
        %819 = vmatpush2.msra.mxu0 0.0
        %820 = vmatprep.mubr.f32.mxu0 0.0
        %821 = vmatmul.mubr.f32.gmra.mxu0 %v677
        %v822 = vpop.f32.mrf.mxu0
        %v823 = vadd.f32 0.0, %v822
        %v824 = vpop.f32.mrf.mxu0
        %825 = vdwg.mxu0
        %v826 = vadd.f32 %v584, %v752
        %v827 = vadd.f32 %v586, %v754
        %v828 = vadd.f32 %v655, %v823
        %v829 = vld [vmem:[#allocation2] sm:$0x77]
        %v830 = vld [vmem:[#allocation2 + $0x8] sm:$0x77]
        %v833 = vcombine.high %v829, %v829
        %v834 = vcombine.high %v830, %v830
        %835 = vrot.lane.b32.xlu0 %v829, 110
        %v836 = vpop.permute.xlu0 %835
        %837 = vrot.lane.b32.xlu0 %v833, 110
        %v838 = vpop.permute.xlu0 %837
        %839 = vrot.lane.b32.xlu0 %v830, 110
        %v840 = vpop.permute.xlu0 %839
        %841 = vrot.lane.b32.xlu0 %v834, 110
        %v842 = vpop.permute.xlu0 %841
        %vm843 = vcmask 900096
        %v844 = vsel %vm843, %v836, %v838
        %v845 = vsel %vm843, %v838, %v840
        %v846 = vsel %vm843, %v840, %v842
        %v848 = vsel %vm356, %v331, 0
        %v850 = vsel %vm302, %v844, 0
        %v852 = vsel %vm302, %v845, 0
        %v854 = vsel %vm302, %v846, 0
        %856 = vmatprep.subr.mxu0 0.0
        %857 = vmatpush1.msra.mxu0 0.0
        %858 = vmatprep.subr.mxu0 0.0
        %859 = vmatpush1.msra.mxu0 0.0
        %860 = vmatprep.subr.mxu0 0.0
        %861 = vmatpush1.msra.mxu0 0.0
        %862 = vmatprep.subr.mxu0 0.0
        %863 = vmatpush1.msra.mxu0 0.0
        %864 = vmatprep.subr.mxu0 0.0
        %865 = vmatpush1.msra.mxu0 0.0
        %866 = vmatprep.subr.mxu0 0.0
        %867 = vmatpush1.msra.mxu0 0.0
        %868 = vmatprep.subr.mxu0 0.0
        %869 = vmatpush1.msra.mxu0 0.0
        %870 = vmatprep.subr.mxu0 0.0
        %871 = vmatpush1.msra.mxu0 0.0
        %872 = vmatprep.subr.mxu0 0.0
        %873 = vmatpush1.msra.mxu0 0.0
        %874 = vmatprep.subr.mxu0 0.0
        %875 = vmatpush1.msra.mxu0 0.0
        %876 = vmatprep.subr.mxu0 0.0
        %877 = vmatpush1.msra.mxu0 0.0
        %878 = vmatprep.subr.mxu0 0.0
        %879 = vmatpush1.msra.mxu0 0.0
        %880 = vmatprep.subr.mxu0 0.0
        %881 = vmatpush1.msra.mxu0 0.0
        %882 = vmatprep.subr.mxu0 0.0
        %883 = vmatpush1.msra.mxu0 0.0
        %884 = vmatprep.subr.mxu0 0.0
        %885 = vmatpush1.msra.mxu0 0.0
        %886 = vmatprep.subr.mxu0 %v852
        %887 = vmatpush1.msra.mxu0 %v850
        %888 = vmatprep.subr.mxu0 0.0
        %889 = vmatpush2.msra.mxu0 0.0
        %890 = vmatprep.subr.mxu0 0.0
        %891 = vmatpush2.msra.mxu0 0.0
        %892 = vmatprep.subr.mxu0 0.0
        %893 = vmatpush2.msra.mxu0 0.0
        %894 = vmatprep.subr.mxu0 0.0
        %895 = vmatpush2.msra.mxu0 0.0
        %896 = vmatprep.subr.mxu0 0.0
        %897 = vmatpush2.msra.mxu0 0.0
        %898 = vmatprep.subr.mxu0 0.0
        %899 = vmatpush2.msra.mxu0 0.0
        %900 = vmatprep.subr.mxu0 0.0
        %901 = vmatpush2.msra.mxu0 0.0
        %902 = vmatprep.subr.mxu0 0.0
        %903 = vmatpush2.msra.mxu0 0.0
        %904 = vmatprep.subr.mxu0 0.0
        %905 = vmatpush2.msra.mxu0 0.0
        %906 = vmatprep.subr.mxu0 0.0
        %907 = vmatpush2.msra.mxu0 0.0
        %908 = vmatprep.subr.mxu0 0.0
        %909 = vmatpush2.msra.mxu0 0.0
        %910 = vmatprep.subr.mxu0 0.0
        %911 = vmatpush2.msra.mxu0 0.0
        %912 = vmatprep.subr.mxu0 0.0
        %913 = vmatpush2.msra.mxu0 0.0
        %914 = vmatprep.subr.mxu0 0.0
        %915 = vmatpush2.msra.mxu0 0.0
        %916 = vmatprep.subr.mxu0 0.0
        %917 = vmatpush2.msra.mxu0 0.0
        %918 = vmatprep.subr.mxu0 0.0
        %919 = vmatpush2.msra.mxu0 0.0
        %920 = vmatprep.mubr.f32.mxu0 0.0
        %921 = vmatmul.mubr.f32.gmra.mxu0 %v848
        %v922 = vpop.f32.mrf.mxu0
        %v923 = vadd.f32 0.0, %v922
        %v924 = vpop.f32.mrf.mxu0
        %v925 = vadd.f32 0.0, %v924
        %926 = vdwg.mxu0
        %927 = vmatprep.subr.mxu0 0.0
        %928 = vmatpush1.msra.mxu0 0.0
        %929 = vmatprep.subr.mxu0 0.0
        %930 = vmatpush1.msra.mxu0 0.0
        %931 = vmatprep.subr.mxu0 0.0
        %932 = vmatpush1.msra.mxu0 0.0
        %933 = vmatprep.subr.mxu0 0.0
        %934 = vmatpush1.msra.mxu0 0.0
        %935 = vmatprep.subr.mxu0 0.0
        %936 = vmatpush1.msra.mxu0 0.0
        %937 = vmatprep.subr.mxu0 0.0
        %938 = vmatpush1.msra.mxu0 0.0
        %939 = vmatprep.subr.mxu0 0.0
        %940 = vmatpush1.msra.mxu0 0.0
        %941 = vmatprep.subr.mxu0 0.0
        %942 = vmatpush1.msra.mxu0 0.0
        %943 = vmatprep.subr.mxu0 0.0
        %944 = vmatpush1.msra.mxu0 0.0
        %945 = vmatprep.subr.mxu0 0.0
        %946 = vmatpush1.msra.mxu0 0.0
        %947 = vmatprep.subr.mxu0 0.0
        %948 = vmatpush1.msra.mxu0 0.0
        %949 = vmatprep.subr.mxu0 0.0
        %950 = vmatpush1.msra.mxu0 0.0
        %951 = vmatprep.subr.mxu0 0.0
        %952 = vmatpush1.msra.mxu0 0.0
        %953 = vmatprep.subr.mxu0 0.0
        %954 = vmatpush1.msra.mxu0 0.0
        %955 = vmatprep.subr.mxu0 0.0
        %956 = vmatpush1.msra.mxu0 0.0
        %957 = vmatprep.subr.mxu0 0.0
        %958 = vmatpush1.msra.mxu0 %v854
        %959 = vmatprep.subr.mxu0 0.0
        %960 = vmatpush2.msra.mxu0 0.0
        %961 = vmatprep.subr.mxu0 0.0
        %962 = vmatpush2.msra.mxu0 0.0
        %963 = vmatprep.subr.mxu0 0.0
        %964 = vmatpush2.msra.mxu0 0.0
        %965 = vmatprep.subr.mxu0 0.0
        %966 = vmatpush2.msra.mxu0 0.0
        %967 = vmatprep.subr.mxu0 0.0
        %968 = vmatpush2.msra.mxu0 0.0
        %969 = vmatprep.subr.mxu0 0.0
        %970 = vmatpush2.msra.mxu0 0.0
        %971 = vmatprep.subr.mxu0 0.0
        %972 = vmatpush2.msra.mxu0 0.0
        %973 = vmatprep.subr.mxu0 0.0
        %974 = vmatpush2.msra.mxu0 0.0
        %975 = vmatprep.subr.mxu0 0.0
        %976 = vmatpush2.msra.mxu0 0.0
        %977 = vmatprep.subr.mxu0 0.0
        %978 = vmatpush2.msra.mxu0 0.0
        %979 = vmatprep.subr.mxu0 0.0
        %980 = vmatpush2.msra.mxu0 0.0
        %981 = vmatprep.subr.mxu0 0.0
        %982 = vmatpush2.msra.mxu0 0.0
        %983 = vmatprep.subr.mxu0 0.0
        %984 = vmatpush2.msra.mxu0 0.0
        %985 = vmatprep.subr.mxu0 0.0
        %986 = vmatpush2.msra.mxu0 0.0
        %987 = vmatprep.subr.mxu0 0.0
        %988 = vmatpush2.msra.mxu0 0.0
        %989 = vmatprep.subr.mxu0 0.0
        %990 = vmatpush2.msra.mxu0 0.0
        %991 = vmatprep.mubr.f32.mxu0 0.0
        %992 = vmatmul.mubr.f32.gmra.mxu0 %v848
        %v993 = vpop.f32.mrf.mxu0
        %v994 = vadd.f32 0.0, %v993
        %v995 = vpop.f32.mrf.mxu0
        %996 = vdwg.mxu0
        %v997 = vadd.f32 %v826, %v923
        %v998 = vadd.f32 %v827, %v925
        %v999 = vadd.f32 %v828, %v994
        %v1000 = vld [vmem:[#allocation2] sm:$0x77]
        %v1001 = vld [vmem:[#allocation2 + $0x8] sm:$0x77]
        %v1004 = vcombine.high %v1000, %v1000
        %v1005 = vcombine.high %v1001, %v1001
        %1006 = vrot.lane.b32.xlu0 %v1000, 109
        %v1007 = vpop.permute.xlu0 %1006
        %1008 = vrot.lane.b32.xlu0 %v1004, 109
        %v1009 = vpop.permute.xlu0 %1008
        %1010 = vrot.lane.b32.xlu0 %v1001, 109
        %v1011 = vpop.permute.xlu0 %1010
        %1012 = vrot.lane.b32.xlu0 %v1005, 109
        %v1013 = vpop.permute.xlu0 %1012
        %vm1014 = vcmask 891904
        %v1015 = vsel %vm1014, %v1007, %v1009
        %v1016 = vsel %vm1014, %v1009, %v1011
        %v1017 = vsel %vm1014, %v1011, %v1013
        %v1019 = vsel %vm356, %v332, 0
        %v1021 = vsel %vm302, %v1015, 0
        %v1023 = vsel %vm302, %v1016, 0
        %v1025 = vsel %vm302, %v1017, 0
        %1027 = vmatprep.subr.mxu0 0.0
        %1028 = vmatpush1.msra.mxu0 0.0
        %1029 = vmatprep.subr.mxu0 0.0
        %1030 = vmatpush1.msra.mxu0 0.0
        %1031 = vmatprep.subr.mxu0 0.0
        %1032 = vmatpush1.msra.mxu0 0.0
        %1033 = vmatprep.subr.mxu0 0.0
        %1034 = vmatpush1.msra.mxu0 0.0
        %1035 = vmatprep.subr.mxu0 0.0
        %1036 = vmatpush1.msra.mxu0 0.0
        %1037 = vmatprep.subr.mxu0 0.0
        %1038 = vmatpush1.msra.mxu0 0.0
        %1039 = vmatprep.subr.mxu0 0.0
        %1040 = vmatpush1.msra.mxu0 0.0
        %1041 = vmatprep.subr.mxu0 0.0
        %1042 = vmatpush1.msra.mxu0 0.0
        %1043 = vmatprep.subr.mxu0 0.0
        %1044 = vmatpush1.msra.mxu0 0.0
        %1045 = vmatprep.subr.mxu0 0.0
        %1046 = vmatpush1.msra.mxu0 0.0
        %1047 = vmatprep.subr.mxu0 0.0
        %1048 = vmatpush1.msra.mxu0 0.0
        %1049 = vmatprep.subr.mxu0 0.0
        %1050 = vmatpush1.msra.mxu0 0.0
        %1051 = vmatprep.subr.mxu0 0.0
        %1052 = vmatpush1.msra.mxu0 0.0
        %1053 = vmatprep.subr.mxu0 0.0
        %1054 = vmatpush1.msra.mxu0 0.0
        %1055 = vmatprep.subr.mxu0 0.0
        %1056 = vmatpush1.msra.mxu0 0.0
        %1057 = vmatprep.subr.mxu0 %v1023
        %1058 = vmatpush1.msra.mxu0 %v1021
        %1059 = vmatprep.subr.mxu0 0.0
        %1060 = vmatpush2.msra.mxu0 0.0
        %1061 = vmatprep.subr.mxu0 0.0
        %1062 = vmatpush2.msra.mxu0 0.0
        %1063 = vmatprep.subr.mxu0 0.0
        %1064 = vmatpush2.msra.mxu0 0.0
        %1065 = vmatprep.subr.mxu0 0.0
        %1066 = vmatpush2.msra.mxu0 0.0
        %1067 = vmatprep.subr.mxu0 0.0
        %1068 = vmatpush2.msra.mxu0 0.0
        %1069 = vmatprep.subr.mxu0 0.0
        %1070 = vmatpush2.msra.mxu0 0.0
        %1071 = vmatprep.subr.mxu0 0.0
        %1072 = vmatpush2.msra.mxu0 0.0
        %1073 = vmatprep.subr.mxu0 0.0
        %1074 = vmatpush2.msra.mxu0 0.0
        %1075 = vmatprep.subr.mxu0 0.0
        %1076 = vmatpush2.msra.mxu0 0.0
        %1077 = vmatprep.subr.mxu0 0.0
        %1078 = vmatpush2.msra.mxu0 0.0
        %1079 = vmatprep.subr.mxu0 0.0
        %1080 = vmatpush2.msra.mxu0 0.0
        %1081 = vmatprep.subr.mxu0 0.0
        %1082 = vmatpush2.msra.mxu0 0.0
        %1083 = vmatprep.subr.mxu0 0.0
        %1084 = vmatpush2.msra.mxu0 0.0
        %1085 = vmatprep.subr.mxu0 0.0
        %1086 = vmatpush2.msra.mxu0 0.0
        %1087 = vmatprep.subr.mxu0 0.0
        %1088 = vmatpush2.msra.mxu0 0.0
        %1089 = vmatprep.subr.mxu0 0.0
        %1090 = vmatpush2.msra.mxu0 0.0
        %1091 = vmatprep.mubr.f32.mxu0 0.0
        %1092 = vmatmul.mubr.f32.gmra.mxu0 %v1019
        %v1093 = vpop.f32.mrf.mxu0
        %v1094 = vadd.f32 0.0, %v1093
        %v1095 = vpop.f32.mrf.mxu0
        %v1096 = vadd.f32 0.0, %v1095
        %1097 = vdwg.mxu0
        %1098 = vmatprep.subr.mxu0 0.0
        %1099 = vmatpush1.msra.mxu0 0.0
        %1100 = vmatprep.subr.mxu0 0.0
        %1101 = vmatpush1.msra.mxu0 0.0
        %1102 = vmatprep.subr.mxu0 0.0
        %1103 = vmatpush1.msra.mxu0 0.0
        %1104 = vmatprep.subr.mxu0 0.0
        %1105 = vmatpush1.msra.mxu0 0.0
        %1106 = vmatprep.subr.mxu0 0.0
        %1107 = vmatpush1.msra.mxu0 0.0
        %1108 = vmatprep.subr.mxu0 0.0
        %1109 = vmatpush1.msra.mxu0 0.0
        %1110 = vmatprep.subr.mxu0 0.0
        %1111 = vmatpush1.msra.mxu0 0.0
        %1112 = vmatprep.subr.mxu0 0.0
        %1113 = vmatpush1.msra.mxu0 0.0
        %1114 = vmatprep.subr.mxu0 0.0
        %1115 = vmatpush1.msra.mxu0 0.0
        %1116 = vmatprep.subr.mxu0 0.0
        %1117 = vmatpush1.msra.mxu0 0.0
        %1118 = vmatprep.subr.mxu0 0.0
        %1119 = vmatpush1.msra.mxu0 0.0
        %1120 = vmatprep.subr.mxu0 0.0
        %1121 = vmatpush1.msra.mxu0 0.0
        %1122 = vmatprep.subr.mxu0 0.0
        %1123 = vmatpush1.msra.mxu0 0.0
        %1124 = vmatprep.subr.mxu0 0.0
        %1125 = vmatpush1.msra.mxu0 0.0
        %1126 = vmatprep.subr.mxu0 0.0
        %1127 = vmatpush1.msra.mxu0 0.0
        %1128 = vmatprep.subr.mxu0 0.0
        %1129 = vmatpush1.msra.mxu0 %v1025
        %1130 = vmatprep.subr.mxu0 0.0
        %1131 = vmatpush2.msra.mxu0 0.0
        %1132 = vmatprep.subr.mxu0 0.0
        %1133 = vmatpush2.msra.mxu0 0.0
        %1134 = vmatprep.subr.mxu0 0.0
        %1135 = vmatpush2.msra.mxu0 0.0
        %1136 = vmatprep.subr.mxu0 0.0
        %1137 = vmatpush2.msra.mxu0 0.0
        %1138 = vmatprep.subr.mxu0 0.0
        %1139 = vmatpush2.msra.mxu0 0.0
        %1140 = vmatprep.subr.mxu0 0.0
        %1141 = vmatpush2.msra.mxu0 0.0
        %1142 = vmatprep.subr.mxu0 0.0
        %1143 = vmatpush2.msra.mxu0 0.0
        %1144 = vmatprep.subr.mxu0 0.0
        %1145 = vmatpush2.msra.mxu0 0.0
        %1146 = vmatprep.subr.mxu0 0.0
        %1147 = vmatpush2.msra.mxu0 0.0
        %1148 = vmatprep.subr.mxu0 0.0
        %1149 = vmatpush2.msra.mxu0 0.0
        %1150 = vmatprep.subr.mxu0 0.0
        %1151 = vmatpush2.msra.mxu0 0.0
        %1152 = vmatprep.subr.mxu0 0.0
        %1153 = vmatpush2.msra.mxu0 0.0
        %1154 = vmatprep.subr.mxu0 0.0
        %1155 = vmatpush2.msra.mxu0 0.0
        %1156 = vmatprep.subr.mxu0 0.0
        %1157 = vmatpush2.msra.mxu0 0.0
        %1158 = vmatprep.subr.mxu0 0.0
        %1159 = vmatpush2.msra.mxu0 0.0
        %1160 = vmatprep.subr.mxu0 0.0
        %1161 = vmatpush2.msra.mxu0 0.0
        %1162 = vmatprep.mubr.f32.mxu0 0.0
        %1163 = vmatmul.mubr.f32.gmra.mxu0 %v1019
        %v1164 = vpop.f32.mrf.mxu0
        %v1165 = vadd.f32 0.0, %v1164
        %v1166 = vpop.f32.mrf.mxu0
        %1167 = vdwg.mxu0
        %v1168 = vadd.f32 %v997, %v1094
        %v1169 = vadd.f32 %v998, %v1096
        %v1170 = vadd.f32 %v999, %v1165
        %v1171 = vld [vmem:[#allocation2] sm:$0x77]
        %v1172 = vld [vmem:[#allocation2 + $0x8] sm:$0x77]
        %v1175 = vcombine.high %v1171, %v1171
        %v1176 = vcombine.high %v1172, %v1172
        %1177 = vrot.lane.b32.xlu0 %v1171, 108
        %v1178 = vpop.permute.xlu0 %1177
        %1179 = vrot.lane.b32.xlu0 %v1175, 108
        %v1180 = vpop.permute.xlu0 %1179
        %1181 = vrot.lane.b32.xlu0 %v1172, 108
        %v1182 = vpop.permute.xlu0 %1181
        %1183 = vrot.lane.b32.xlu0 %v1176, 108
        %v1184 = vpop.permute.xlu0 %1183
        %vm1185 = vcmask 883712
        %v1186 = vsel %vm1185, %v1178, %v1180
        %v1187 = vsel %vm1185, %v1180, %v1182
        %v1188 = vsel %vm1185, %v1182, %v1184
        %v1190 = vsel %vm356, %v333, 0
        %v1192 = vsel %vm302, %v1186, 0
        %v1194 = vsel %vm302, %v1187, 0
        %v1196 = vsel %vm302, %v1188, 0
        %1198 = vmatprep.subr.mxu0 0.0
        %1199 = vmatpush1.msra.mxu0 0.0
        %1200 = vmatprep.subr.mxu0 0.0
        %1201 = vmatpush1.msra.mxu0 0.0
        %1202 = vmatprep.subr.mxu0 0.0
        %1203 = vmatpush1.msra.mxu0 0.0
        %1204 = vmatprep.subr.mxu0 0.0
        %1205 = vmatpush1.msra.mxu0 0.0
        %1206 = vmatprep.subr.mxu0 0.0
        %1207 = vmatpush1.msra.mxu0 0.0
        %1208 = vmatprep.subr.mxu0 0.0
        %1209 = vmatpush1.msra.mxu0 0.0
        %1210 = vmatprep.subr.mxu0 0.0
        %1211 = vmatpush1.msra.mxu0 0.0
        %1212 = vmatprep.subr.mxu0 0.0
        %1213 = vmatpush1.msra.mxu0 0.0
        %1214 = vmatprep.subr.mxu0 0.0
        %1215 = vmatpush1.msra.mxu0 0.0
        %1216 = vmatprep.subr.mxu0 0.0
        %1217 = vmatpush1.msra.mxu0 0.0
        %1218 = vmatprep.subr.mxu0 0.0
        %1219 = vmatpush1.msra.mxu0 0.0
        %1220 = vmatprep.subr.mxu0 0.0
        %1221 = vmatpush1.msra.mxu0 0.0
        %1222 = vmatprep.subr.mxu0 0.0
        %1223 = vmatpush1.msra.mxu0 0.0
        %1224 = vmatprep.subr.mxu0 0.0
        %1225 = vmatpush1.msra.mxu0 0.0
        %1226 = vmatprep.subr.mxu0 0.0
        %1227 = vmatpush1.msra.mxu0 0.0
        %1228 = vmatprep.subr.mxu0 %v1194
        %1229 = vmatpush1.msra.mxu0 %v1192
        %1230 = vmatprep.subr.mxu0 0.0
        %1231 = vmatpush2.msra.mxu0 0.0
        %1232 = vmatprep.subr.mxu0 0.0
        %1233 = vmatpush2.msra.mxu0 0.0
        %1234 = vmatprep.subr.mxu0 0.0
        %1235 = vmatpush2.msra.mxu0 0.0
        %1236 = vmatprep.subr.mxu0 0.0
        %1237 = vmatpush2.msra.mxu0 0.0
        %1238 = vmatprep.subr.mxu0 0.0
        %1239 = vmatpush2.msra.mxu0 0.0
        %1240 = vmatprep.subr.mxu0 0.0
        %1241 = vmatpush2.msra.mxu0 0.0
        %1242 = vmatprep.subr.mxu0 0.0
        %1243 = vmatpush2.msra.mxu0 0.0
        %1244 = vmatprep.subr.mxu0 0.0
        %1245 = vmatpush2.msra.mxu0 0.0
        %1246 = vmatprep.subr.mxu0 0.0
        %1247 = vmatpush2.msra.mxu0 0.0
        %1248 = vmatprep.subr.mxu0 0.0
        %1249 = vmatpush2.msra.mxu0 0.0
        %1250 = vmatprep.subr.mxu0 0.0
        %1251 = vmatpush2.msra.mxu0 0.0
        %1252 = vmatprep.subr.mxu0 0.0
        %1253 = vmatpush2.msra.mxu0 0.0
        %1254 = vmatprep.subr.mxu0 0.0
        %1255 = vmatpush2.msra.mxu0 0.0
        %1256 = vmatprep.subr.mxu0 0.0
        %1257 = vmatpush2.msra.mxu0 0.0
        %1258 = vmatprep.subr.mxu0 0.0
        %1259 = vmatpush2.msra.mxu0 0.0
        %1260 = vmatprep.subr.mxu0 0.0
        %1261 = vmatpush2.msra.mxu0 0.0
        %1262 = vmatprep.mubr.f32.mxu0 0.0
        %1263 = vmatmul.mubr.f32.gmra.mxu0 %v1190
        %v1264 = vpop.f32.mrf.mxu0
        %v1265 = vadd.f32 0.0, %v1264
        %v1266 = vpop.f32.mrf.mxu0
        %v1267 = vadd.f32 0.0, %v1266
        %1268 = vdwg.mxu0
        %1269 = vmatprep.subr.mxu0 0.0
        %1270 = vmatpush1.msra.mxu0 0.0
        %1271 = vmatprep.subr.mxu0 0.0
        %1272 = vmatpush1.msra.mxu0 0.0
        %1273 = vmatprep.subr.mxu0 0.0
        %1274 = vmatpush1.msra.mxu0 0.0
        %1275 = vmatprep.subr.mxu0 0.0
        %1276 = vmatpush1.msra.mxu0 0.0
        %1277 = vmatprep.subr.mxu0 0.0
        %1278 = vmatpush1.msra.mxu0 0.0
        %1279 = vmatprep.subr.mxu0 0.0
        %1280 = vmatpush1.msra.mxu0 0.0
        %1281 = vmatprep.subr.mxu0 0.0
        %1282 = vmatpush1.msra.mxu0 0.0
        %1283 = vmatprep.subr.mxu0 0.0
        %1284 = vmatpush1.msra.mxu0 0.0
        %1285 = vmatprep.subr.mxu0 0.0
        %1286 = vmatpush1.msra.mxu0 0.0
        %1287 = vmatprep.subr.mxu0 0.0
        %1288 = vmatpush1.msra.mxu0 0.0
        %1289 = vmatprep.subr.mxu0 0.0
        %1290 = vmatpush1.msra.mxu0 0.0
        %1291 = vmatprep.subr.mxu0 0.0
        %1292 = vmatpush1.msra.mxu0 0.0
        %1293 = vmatprep.subr.mxu0 0.0
        %1294 = vmatpush1.msra.mxu0 0.0
        %1295 = vmatprep.subr.mxu0 0.0
        %1296 = vmatpush1.msra.mxu0 0.0
        %1297 = vmatprep.subr.mxu0 0.0
        %1298 = vmatpush1.msra.mxu0 0.0
        %1299 = vmatprep.subr.mxu0 0.0
        %1300 = vmatpush1.msra.mxu0 %v1196
        %1301 = vmatprep.subr.mxu0 0.0
        %1302 = vmatpush2.msra.mxu0 0.0
        %1303 = vmatprep.subr.mxu0 0.0
        %1304 = vmatpush2.msra.mxu0 0.0
        %1305 = vmatprep.subr.mxu0 0.0
        %1306 = vmatpush2.msra.mxu0 0.0
        %1307 = vmatprep.subr.mxu0 0.0
        %1308 = vmatpush2.msra.mxu0 0.0
        %1309 = vmatprep.subr.mxu0 0.0
        %1310 = vmatpush2.msra.mxu0 0.0
        %1311 = vmatprep.subr.mxu0 0.0
        %1312 = vmatpush2.msra.mxu0 0.0
        %1313 = vmatprep.subr.mxu0 0.0
        %1314 = vmatpush2.msra.mxu0 0.0
        %1315 = vmatprep.subr.mxu0 0.0
        %1316 = vmatpush2.msra.mxu0 0.0
        %1317 = vmatprep.subr.mxu0 0.0
        %1318 = vmatpush2.msra.mxu0 0.0
        %1319 = vmatprep.subr.mxu0 0.0
        %1320 = vmatpush2.msra.mxu0 0.0
        %1321 = vmatprep.subr.mxu0 0.0
        %1322 = vmatpush2.msra.mxu0 0.0
        %1323 = vmatprep.subr.mxu0 0.0
        %1324 = vmatpush2.msra.mxu0 0.0
        %1325 = vmatprep.subr.mxu0 0.0
        %1326 = vmatpush2.msra.mxu0 0.0
        %1327 = vmatprep.subr.mxu0 0.0
        %1328 = vmatpush2.msra.mxu0 0.0
        %1329 = vmatprep.subr.mxu0 0.0
        %1330 = vmatpush2.msra.mxu0 0.0
        %1331 = vmatprep.subr.mxu0 0.0
        %1332 = vmatpush2.msra.mxu0 0.0
        %1333 = vmatprep.mubr.f32.mxu0 0.0
        %1334 = vmatmul.mubr.f32.gmra.mxu0 %v1190
        %v1335 = vpop.f32.mrf.mxu0
        %v1336 = vadd.f32 0.0, %v1335
        %v1337 = vpop.f32.mrf.mxu0
        %1338 = vdwg.mxu0
        %v1339 = vadd.f32 %v1168, %v1265
        %v1340 = vadd.f32 %v1169, %v1267
        %v1341 = vadd.f32 %v1170, %v1336
        %v1342 = vld [vmem:[#allocation2] sm:$0x77]
        %v1343 = vld [vmem:[#allocation2 + $0x8] sm:$0x77]
        %v1346 = vcombine.high %v1342, %v1342
        %v1347 = vcombine.high %v1343, %v1343
        %1348 = vrot.lane.b32.xlu0 %v1342, 92
        %v1349 = vpop.permute.xlu0 %1348
        %1350 = vrot.lane.b32.xlu0 %v1346, 92
        %v1351 = vpop.permute.xlu0 %1350
        %1352 = vrot.lane.b32.xlu0 %v1343, 92
        %v1353 = vpop.permute.xlu0 %1352
        %1354 = vrot.lane.b32.xlu0 %v1347, 92
        %v1355 = vpop.permute.xlu0 %1354
        %vm1356 = vcmask 752640
        %v1357 = vsel %vm1356, %v1349, %v1351
        %v1358 = vsel %vm1356, %v1351, %v1353
        %v1359 = vsel %vm1356, %v1353, %v1355
        %v1361 = vsel %vm356, %v334, 0
        %v1363 = vsel %vm302, %v1357, 0
        %v1365 = vsel %vm302, %v1358, 0
        %v1367 = vsel %vm302, %v1359, 0
        %1369 = vmatprep.subr.mxu0 0.0
        %1370 = vmatpush1.msra.mxu0 0.0
        %1371 = vmatprep.subr.mxu0 0.0
        %1372 = vmatpush1.msra.mxu0 0.0
        %1373 = vmatprep.subr.mxu0 0.0
        %1374 = vmatpush1.msra.mxu0 0.0
        %1375 = vmatprep.subr.mxu0 0.0
        %1376 = vmatpush1.msra.mxu0 0.0
        %1377 = vmatprep.subr.mxu0 0.0
        %1378 = vmatpush1.msra.mxu0 0.0
        %1379 = vmatprep.subr.mxu0 0.0
        %1380 = vmatpush1.msra.mxu0 0.0
        %1381 = vmatprep.subr.mxu0 0.0
        %1382 = vmatpush1.msra.mxu0 0.0
        %1383 = vmatprep.subr.mxu0 0.0
        %1384 = vmatpush1.msra.mxu0 0.0
        %1385 = vmatprep.subr.mxu0 0.0
        %1386 = vmatpush1.msra.mxu0 0.0
        %1387 = vmatprep.subr.mxu0 0.0
        %1388 = vmatpush1.msra.mxu0 0.0
        %1389 = vmatprep.subr.mxu0 0.0
        %1390 = vmatpush1.msra.mxu0 0.0
        %1391 = vmatprep.subr.mxu0 0.0
        %1392 = vmatpush1.msra.mxu0 0.0
        %1393 = vmatprep.subr.mxu0 0.0
        %1394 = vmatpush1.msra.mxu0 0.0
        %1395 = vmatprep.subr.mxu0 0.0
        %1396 = vmatpush1.msra.mxu0 0.0
        %1397 = vmatprep.subr.mxu0 0.0
        %1398 = vmatpush1.msra.mxu0 0.0
        %1399 = vmatprep.subr.mxu0 %v1365
        %1400 = vmatpush1.msra.mxu0 %v1363
        %1401 = vmatprep.subr.mxu0 0.0
        %1402 = vmatpush2.msra.mxu0 0.0
        %1403 = vmatprep.subr.mxu0 0.0
        %1404 = vmatpush2.msra.mxu0 0.0
        %1405 = vmatprep.subr.mxu0 0.0
        %1406 = vmatpush2.msra.mxu0 0.0
        %1407 = vmatprep.subr.mxu0 0.0
        %1408 = vmatpush2.msra.mxu0 0.0
        %1409 = vmatprep.subr.mxu0 0.0
        %1410 = vmatpush2.msra.mxu0 0.0
        %1411 = vmatprep.subr.mxu0 0.0
        %1412 = vmatpush2.msra.mxu0 0.0
        %1413 = vmatprep.subr.mxu0 0.0
        %1414 = vmatpush2.msra.mxu0 0.0
        %1415 = vmatprep.subr.mxu0 0.0
        %1416 = vmatpush2.msra.mxu0 0.0
        %1417 = vmatprep.subr.mxu0 0.0
        %1418 = vmatpush2.msra.mxu0 0.0
        %1419 = vmatprep.subr.mxu0 0.0
        %1420 = vmatpush2.msra.mxu0 0.0
        %1421 = vmatprep.subr.mxu0 0.0
        %1422 = vmatpush2.msra.mxu0 0.0
        %1423 = vmatprep.subr.mxu0 0.0
        %1424 = vmatpush2.msra.mxu0 0.0
        %1425 = vmatprep.subr.mxu0 0.0
        %1426 = vmatpush2.msra.mxu0 0.0
        %1427 = vmatprep.subr.mxu0 0.0
        %1428 = vmatpush2.msra.mxu0 0.0
        %1429 = vmatprep.subr.mxu0 0.0
        %1430 = vmatpush2.msra.mxu0 0.0
        %1431 = vmatprep.subr.mxu0 0.0
        %1432 = vmatpush2.msra.mxu0 0.0
        %1433 = vmatprep.mubr.f32.mxu0 0.0
        %1434 = vmatmul.mubr.f32.gmra.mxu0 %v1361
        %v1435 = vpop.f32.mrf.mxu0
        %v1436 = vadd.f32 0.0, %v1435
        %v1437 = vpop.f32.mrf.mxu0
        %v1438 = vadd.f32 0.0, %v1437
        %1439 = vdwg.mxu0
        %1440 = vmatprep.subr.mxu0 0.0
        %1441 = vmatpush1.msra.mxu0 0.0
        %1442 = vmatprep.subr.mxu0 0.0
        %1443 = vmatpush1.msra.mxu0 0.0
        %1444 = vmatprep.subr.mxu0 0.0
        %1445 = vmatpush1.msra.mxu0 0.0
        %1446 = vmatprep.subr.mxu0 0.0
        %1447 = vmatpush1.msra.mxu0 0.0
        %1448 = vmatprep.subr.mxu0 0.0
        %1449 = vmatpush1.msra.mxu0 0.0
        %1450 = vmatprep.subr.mxu0 0.0
        %1451 = vmatpush1.msra.mxu0 0.0
        %1452 = vmatprep.subr.mxu0 0.0
        %1453 = vmatpush1.msra.mxu0 0.0
        %1454 = vmatprep.subr.mxu0 0.0
        %1455 = vmatpush1.msra.mxu0 0.0
        %1456 = vmatprep.subr.mxu0 0.0
        %1457 = vmatpush1.msra.mxu0 0.0
        %1458 = vmatprep.subr.mxu0 0.0
        %1459 = vmatpush1.msra.mxu0 0.0
        %1460 = vmatprep.subr.mxu0 0.0
        %1461 = vmatpush1.msra.mxu0 0.0
        %1462 = vmatprep.subr.mxu0 0.0
        %1463 = vmatpush1.msra.mxu0 0.0
        %1464 = vmatprep.subr.mxu0 0.0
        %1465 = vmatpush1.msra.mxu0 0.0
        %1466 = vmatprep.subr.mxu0 0.0
        %1467 = vmatpush1.msra.mxu0 0.0
        %1468 = vmatprep.subr.mxu0 0.0
        %1469 = vmatpush1.msra.mxu0 0.0
        %1470 = vmatprep.subr.mxu0 0.0
        %1471 = vmatpush1.msra.mxu0 %v1367
        %1472 = vmatprep.subr.mxu0 0.0
        %1473 = vmatpush2.msra.mxu0 0.0
        %1474 = vmatprep.subr.mxu0 0.0
        %1475 = vmatpush2.msra.mxu0 0.0
        %1476 = vmatprep.subr.mxu0 0.0
        %1477 = vmatpush2.msra.mxu0 0.0
        %1478 = vmatprep.subr.mxu0 0.0
        %1479 = vmatpush2.msra.mxu0 0.0
        %1480 = vmatprep.subr.mxu0 0.0
        %1481 = vmatpush2.msra.mxu0 0.0
        %1482 = vmatprep.subr.mxu0 0.0
        %1483 = vmatpush2.msra.mxu0 0.0
        %1484 = vmatprep.subr.mxu0 0.0
        %1485 = vmatpush2.msra.mxu0 0.0
        %1486 = vmatprep.subr.mxu0 0.0
        %1487 = vmatpush2.msra.mxu0 0.0
        %1488 = vmatprep.subr.mxu0 0.0
        %1489 = vmatpush2.msra.mxu0 0.0
        %1490 = vmatprep.subr.mxu0 0.0
        %1491 = vmatpush2.msra.mxu0 0.0
        %1492 = vmatprep.subr.mxu0 0.0
        %1493 = vmatpush2.msra.mxu0 0.0
        %1494 = vmatprep.subr.mxu0 0.0
        %1495 = vmatpush2.msra.mxu0 0.0
        %1496 = vmatprep.subr.mxu0 0.0
        %1497 = vmatpush2.msra.mxu0 0.0
        %1498 = vmatprep.subr.mxu0 0.0
        %1499 = vmatpush2.msra.mxu0 0.0
        %1500 = vmatprep.subr.mxu0 0.0
        %1501 = vmatpush2.msra.mxu0 0.0
        %1502 = vmatprep.subr.mxu0 0.0
        %1503 = vmatpush2.msra.mxu0 0.0
        %1504 = vmatprep.mubr.f32.mxu0 0.0
        %1505 = vmatmul.mubr.f32.gmra.mxu0 %v1361
        %v1506 = vpop.f32.mrf.mxu0
        %v1507 = vadd.f32 0.0, %v1506
        %v1508 = vpop.f32.mrf.mxu0
        %1509 = vdwg.mxu0
        %v1510 = vadd.f32 %v1339, %v1436
        %v1511 = vadd.f32 %v1340, %v1438
        %v1512 = vadd.f32 %v1341, %v1507
        %v1513 = vld [vmem:[#allocation2] sm:$0x77]
        %v1514 = vld [vmem:[#allocation2 + $0x8] sm:$0x77]
        %v1517 = vcombine.high %v1513, %v1513
        %v1518 = vcombine.high %v1514, %v1514
        %1519 = vrot.lane.b32.xlu0 %v1513, 91
        %v1520 = vpop.permute.xlu0 %1519
        %1521 = vrot.lane.b32.xlu0 %v1517, 91
        %v1522 = vpop.permute.xlu0 %1521
        %1523 = vrot.lane.b32.xlu0 %v1514, 91
        %v1524 = vpop.permute.xlu0 %1523
        %1525 = vrot.lane.b32.xlu0 %v1518, 91
        %v1526 = vpop.permute.xlu0 %1525
        %vm1527 = vcmask 744448
        %v1528 = vsel %vm1527, %v1520, %v1522
        %v1529 = vsel %vm1527, %v1522, %v1524
        %v1530 = vsel %vm1527, %v1524, %v1526
        %v1532 = vsel %vm356, %v335, 0
        %v1534 = vsel %vm302, %v1528, 0
        %v1536 = vsel %vm302, %v1529, 0
        %v1538 = vsel %vm302, %v1530, 0
        %1540 = vmatprep.subr.mxu0 0.0
        %1541 = vmatpush1.msra.mxu0 0.0
        %1542 = vmatprep.subr.mxu0 0.0
        %1543 = vmatpush1.msra.mxu0 0.0
        %1544 = vmatprep.subr.mxu0 0.0
        %1545 = vmatpush1.msra.mxu0 0.0
        %1546 = vmatprep.subr.mxu0 0.0
        %1547 = vmatpush1.msra.mxu0 0.0
        %1548 = vmatprep.subr.mxu0 0.0
        %1549 = vmatpush1.msra.mxu0 0.0
        %1550 = vmatprep.subr.mxu0 0.0
        %1551 = vmatpush1.msra.mxu0 0.0
        %1552 = vmatprep.subr.mxu0 0.0
        %1553 = vmatpush1.msra.mxu0 0.0
        %1554 = vmatprep.subr.mxu0 0.0
        %1555 = vmatpush1.msra.mxu0 0.0
        %1556 = vmatprep.subr.mxu0 0.0
        %1557 = vmatpush1.msra.mxu0 0.0
        %1558 = vmatprep.subr.mxu0 0.0
        %1559 = vmatpush1.msra.mxu0 0.0
        %1560 = vmatprep.subr.mxu0 0.0
        %1561 = vmatpush1.msra.mxu0 0.0
        %1562 = vmatprep.subr.mxu0 0.0
        %1563 = vmatpush1.msra.mxu0 0.0
        %1564 = vmatprep.subr.mxu0 0.0
        %1565 = vmatpush1.msra.mxu0 0.0
        %1566 = vmatprep.subr.mxu0 0.0
        %1567 = vmatpush1.msra.mxu0 0.0
        %1568 = vmatprep.subr.mxu0 0.0
        %1569 = vmatpush1.msra.mxu0 0.0
        %1570 = vmatprep.subr.mxu0 %v1536
        %1571 = vmatpush1.msra.mxu0 %v1534
        %1572 = vmatprep.subr.mxu0 0.0
        %1573 = vmatpush2.msra.mxu0 0.0
        %1574 = vmatprep.subr.mxu0 0.0
        %1575 = vmatpush2.msra.mxu0 0.0
        %1576 = vmatprep.subr.mxu0 0.0
        %1577 = vmatpush2.msra.mxu0 0.0
        %1578 = vmatprep.subr.mxu0 0.0
        %1579 = vmatpush2.msra.mxu0 0.0
        %1580 = vmatprep.subr.mxu0 0.0
        %1581 = vmatpush2.msra.mxu0 0.0
        %1582 = vmatprep.subr.mxu0 0.0
        %1583 = vmatpush2.msra.mxu0 0.0
        %1584 = vmatprep.subr.mxu0 0.0
        %1585 = vmatpush2.msra.mxu0 0.0
        %1586 = vmatprep.subr.mxu0 0.0
        %1587 = vmatpush2.msra.mxu0 0.0
        %1588 = vmatprep.subr.mxu0 0.0
        %1589 = vmatpush2.msra.mxu0 0.0
        %1590 = vmatprep.subr.mxu0 0.0
        %1591 = vmatpush2.msra.mxu0 0.0
        %1592 = vmatprep.subr.mxu0 0.0
        %1593 = vmatpush2.msra.mxu0 0.0
        %1594 = vmatprep.subr.mxu0 0.0
        %1595 = vmatpush2.msra.mxu0 0.0
        %1596 = vmatprep.subr.mxu0 0.0
        %1597 = vmatpush2.msra.mxu0 0.0
        %1598 = vmatprep.subr.mxu0 0.0
        %1599 = vmatpush2.msra.mxu0 0.0
        %1600 = vmatprep.subr.mxu0 0.0
        %1601 = vmatpush2.msra.mxu0 0.0
        %1602 = vmatprep.subr.mxu0 0.0
        %1603 = vmatpush2.msra.mxu0 0.0
        %1604 = vmatprep.mubr.f32.mxu0 0.0
        %1605 = vmatmul.mubr.f32.gmra.mxu0 %v1532
        %v1606 = vpop.f32.mrf.mxu0
        %v1607 = vadd.f32 0.0, %v1606
        %v1608 = vpop.f32.mrf.mxu0
        %v1609 = vadd.f32 0.0, %v1608
        %1610 = vdwg.mxu0
        %1611 = vmatprep.subr.mxu0 0.0
        %1612 = vmatpush1.msra.mxu0 0.0
        %1613 = vmatprep.subr.mxu0 0.0
        %1614 = vmatpush1.msra.mxu0 0.0
        %1615 = vmatprep.subr.mxu0 0.0
        %1616 = vmatpush1.msra.mxu0 0.0
        %1617 = vmatprep.subr.mxu0 0.0
        %1618 = vmatpush1.msra.mxu0 0.0
        %1619 = vmatprep.subr.mxu0 0.0
        %1620 = vmatpush1.msra.mxu0 0.0
        %1621 = vmatprep.subr.mxu0 0.0
        %1622 = vmatpush1.msra.mxu0 0.0
        %1623 = vmatprep.subr.mxu0 0.0
        %1624 = vmatpush1.msra.mxu0 0.0
        %1625 = vmatprep.subr.mxu0 0.0
        %1626 = vmatpush1.msra.mxu0 0.0
        %1627 = vmatprep.subr.mxu0 0.0
        %1628 = vmatpush1.msra.mxu0 0.0
        %1629 = vmatprep.subr.mxu0 0.0
        %1630 = vmatpush1.msra.mxu0 0.0
        %1631 = vmatprep.subr.mxu0 0.0
        %1632 = vmatpush1.msra.mxu0 0.0
        %1633 = vmatprep.subr.mxu0 0.0
        %1634 = vmatpush1.msra.mxu0 0.0
        %1635 = vmatprep.subr.mxu0 0.0
        %1636 = vmatpush1.msra.mxu0 0.0
        %1637 = vmatprep.subr.mxu0 0.0
        %1638 = vmatpush1.msra.mxu0 0.0
        %1639 = vmatprep.subr.mxu0 0.0
        %1640 = vmatpush1.msra.mxu0 0.0
        %1641 = vmatprep.subr.mxu0 0.0
        %1642 = vmatpush1.msra.mxu0 %v1538
        %1643 = vmatprep.subr.mxu0 0.0
        %1644 = vmatpush2.msra.mxu0 0.0
        %1645 = vmatprep.subr.mxu0 0.0
        %1646 = vmatpush2.msra.mxu0 0.0
        %1647 = vmatprep.subr.mxu0 0.0
        %1648 = vmatpush2.msra.mxu0 0.0
        %1649 = vmatprep.subr.mxu0 0.0
        %1650 = vmatpush2.msra.mxu0 0.0
        %1651 = vmatprep.subr.mxu0 0.0
        %1652 = vmatpush2.msra.mxu0 0.0
        %1653 = vmatprep.subr.mxu0 0.0
        %1654 = vmatpush2.msra.mxu0 0.0
        %1655 = vmatprep.subr.mxu0 0.0
        %1656 = vmatpush2.msra.mxu0 0.0
        %1657 = vmatprep.subr.mxu0 0.0
        %1658 = vmatpush2.msra.mxu0 0.0
        %1659 = vmatprep.subr.mxu0 0.0
        %1660 = vmatpush2.msra.mxu0 0.0
        %1661 = vmatprep.subr.mxu0 0.0
        %1662 = vmatpush2.msra.mxu0 0.0
        %1663 = vmatprep.subr.mxu0 0.0
        %1664 = vmatpush2.msra.mxu0 0.0
        %1665 = vmatprep.subr.mxu0 0.0
        %1666 = vmatpush2.msra.mxu0 0.0
        %1667 = vmatprep.subr.mxu0 0.0
        %1668 = vmatpush2.msra.mxu0 0.0
        %1669 = vmatprep.subr.mxu0 0.0
        %1670 = vmatpush2.msra.mxu0 0.0
        %1671 = vmatprep.subr.mxu0 0.0
        %1672 = vmatpush2.msra.mxu0 0.0
        %1673 = vmatprep.subr.mxu0 0.0
        %1674 = vmatpush2.msra.mxu0 0.0
        %1675 = vmatprep.mubr.f32.mxu0 0.0
        %1676 = vmatmul.mubr.f32.gmra.mxu0 %v1532
        %v1677 = vpop.f32.mrf.mxu0
        %v1678 = vadd.f32 0.0, %v1677
        %v1679 = vpop.f32.mrf.mxu0
        %1680 = vdwg.mxu0
        %v1681 = vadd.f32 %v1510, %v1607
        %v1682 = vadd.f32 %v1511, %v1609
        %v1683 = vadd.f32 %v1512, %v1678
        %v1684 = vld [vmem:[#allocation2] sm:$0x77]
        %v1685 = vld [vmem:[#allocation2 + $0x8] sm:$0x77]
        %v1688 = vcombine.high %v1684, %v1684
        %v1689 = vcombine.high %v1685, %v1685
        %1690 = vrot.lane.b32.xlu0 %v1684, 90
        %v1691 = vpop.permute.xlu0 %1690
        %1692 = vrot.lane.b32.xlu0 %v1688, 90
        %v1693 = vpop.permute.xlu0 %1692
        %1694 = vrot.lane.b32.xlu0 %v1685, 90
        %v1695 = vpop.permute.xlu0 %1694
        %1696 = vrot.lane.b32.xlu0 %v1689, 90
        %v1697 = vpop.permute.xlu0 %1696
        %vm1698 = vcmask 736256
        %v1699 = vsel %vm1698, %v1691, %v1693
        %v1700 = vsel %vm1698, %v1693, %v1695
        %v1701 = vsel %vm1698, %v1695, %v1697
        %v1703 = vsel %vm356, %v336, 0
        %v1705 = vsel %vm302, %v1699, 0
        %v1707 = vsel %vm302, %v1700, 0
        %v1709 = vsel %vm302, %v1701, 0
        %1711 = vmatprep.subr.mxu0 0.0
        %1712 = vmatpush1.msra.mxu0 0.0
        %1713 = vmatprep.subr.mxu0 0.0
        %1714 = vmatpush1.msra.mxu0 0.0
        %1715 = vmatprep.subr.mxu0 0.0
        %1716 = vmatpush1.msra.mxu0 0.0
        %1717 = vmatprep.subr.mxu0 0.0
        %1718 = vmatpush1.msra.mxu0 0.0
        %1719 = vmatprep.subr.mxu0 0.0
        %1720 = vmatpush1.msra.mxu0 0.0
        %1721 = vmatprep.subr.mxu0 0.0
        %1722 = vmatpush1.msra.mxu0 0.0
        %1723 = vmatprep.subr.mxu0 0.0
        %1724 = vmatpush1.msra.mxu0 0.0
        %1725 = vmatprep.subr.mxu0 0.0
        %1726 = vmatpush1.msra.mxu0 0.0
        %1727 = vmatprep.subr.mxu0 0.0
        %1728 = vmatpush1.msra.mxu0 0.0
        %1729 = vmatprep.subr.mxu0 0.0
        %1730 = vmatpush1.msra.mxu0 0.0
        %1731 = vmatprep.subr.mxu0 0.0
        %1732 = vmatpush1.msra.mxu0 0.0
        %1733 = vmatprep.subr.mxu0 0.0
        %1734 = vmatpush1.msra.mxu0 0.0
        %1735 = vmatprep.subr.mxu0 0.0
        %1736 = vmatpush1.msra.mxu0 0.0
        %1737 = vmatprep.subr.mxu0 0.0
        %1738 = vmatpush1.msra.mxu0 0.0
        %1739 = vmatprep.subr.mxu0 0.0
        %1740 = vmatpush1.msra.mxu0 0.0
        %1741 = vmatprep.subr.mxu0 %v1707
        %1742 = vmatpush1.msra.mxu0 %v1705
        %1743 = vmatprep.subr.mxu0 0.0
        %1744 = vmatpush2.msra.mxu0 0.0
        %1745 = vmatprep.subr.mxu0 0.0
        %1746 = vmatpush2.msra.mxu0 0.0
        %1747 = vmatprep.subr.mxu0 0.0
        %1748 = vmatpush2.msra.mxu0 0.0
        %1749 = vmatprep.subr.mxu0 0.0
        %1750 = vmatpush2.msra.mxu0 0.0
        %1751 = vmatprep.subr.mxu0 0.0
        %1752 = vmatpush2.msra.mxu0 0.0
        %1753 = vmatprep.subr.mxu0 0.0
        %1754 = vmatpush2.msra.mxu0 0.0
        %1755 = vmatprep.subr.mxu0 0.0
        %1756 = vmatpush2.msra.mxu0 0.0
        %1757 = vmatprep.subr.mxu0 0.0
        %1758 = vmatpush2.msra.mxu0 0.0
        %1759 = vmatprep.subr.mxu0 0.0
        %1760 = vmatpush2.msra.mxu0 0.0
        %1761 = vmatprep.subr.mxu0 0.0
        %1762 = vmatpush2.msra.mxu0 0.0
        %1763 = vmatprep.subr.mxu0 0.0
        %1764 = vmatpush2.msra.mxu0 0.0
        %1765 = vmatprep.subr.mxu0 0.0
        %1766 = vmatpush2.msra.mxu0 0.0
        %1767 = vmatprep.subr.mxu0 0.0
        %1768 = vmatpush2.msra.mxu0 0.0
        %1769 = vmatprep.subr.mxu0 0.0
        %1770 = vmatpush2.msra.mxu0 0.0
        %1771 = vmatprep.subr.mxu0 0.0
        %1772 = vmatpush2.msra.mxu0 0.0
        %1773 = vmatprep.subr.mxu0 0.0
        %1774 = vmatpush2.msra.mxu0 0.0
        %1775 = vmatprep.mubr.f32.mxu0 0.0
        %1776 = vmatmul.mubr.f32.gmra.mxu0 %v1703
        %v1777 = vpop.f32.mrf.mxu0
        %v1778 = vadd.f32 0.0, %v1777
        %v1779 = vpop.f32.mrf.mxu0
        %v1780 = vadd.f32 0.0, %v1779
        %1781 = vdwg.mxu0
        %1782 = vmatprep.subr.mxu0 0.0
        %1783 = vmatpush1.msra.mxu0 0.0
        %1784 = vmatprep.subr.mxu0 0.0
        %1785 = vmatpush1.msra.mxu0 0.0
        %1786 = vmatprep.subr.mxu0 0.0
        %1787 = vmatpush1.msra.mxu0 0.0
        %1788 = vmatprep.subr.mxu0 0.0
        %1789 = vmatpush1.msra.mxu0 0.0
        %1790 = vmatprep.subr.mxu0 0.0
        %1791 = vmatpush1.msra.mxu0 0.0
        %1792 = vmatprep.subr.mxu0 0.0
        %1793 = vmatpush1.msra.mxu0 0.0
        %1794 = vmatprep.subr.mxu0 0.0
        %1795 = vmatpush1.msra.mxu0 0.0
        %1796 = vmatprep.subr.mxu0 0.0
        %1797 = vmatpush1.msra.mxu0 0.0
        %1798 = vmatprep.subr.mxu0 0.0
        %1799 = vmatpush1.msra.mxu0 0.0
        %1800 = vmatprep.subr.mxu0 0.0
        %1801 = vmatpush1.msra.mxu0 0.0
        %1802 = vmatprep.subr.mxu0 0.0
        %1803 = vmatpush1.msra.mxu0 0.0
        %1804 = vmatprep.subr.mxu0 0.0
        %1805 = vmatpush1.msra.mxu0 0.0
        %1806 = vmatprep.subr.mxu0 0.0
        %1807 = vmatpush1.msra.mxu0 0.0
        %1808 = vmatprep.subr.mxu0 0.0
        %1809 = vmatpush1.msra.mxu0 0.0
        %1810 = vmatprep.subr.mxu0 0.0
        %1811 = vmatpush1.msra.mxu0 0.0
        %1812 = vmatprep.subr.mxu0 0.0
        %1813 = vmatpush1.msra.mxu0 %v1709
        %1814 = vmatprep.subr.mxu0 0.0
        %1815 = vmatpush2.msra.mxu0 0.0
        %1816 = vmatprep.subr.mxu0 0.0
        %1817 = vmatpush2.msra.mxu0 0.0
        %1818 = vmatprep.subr.mxu0 0.0
        %1819 = vmatpush2.msra.mxu0 0.0
        %1820 = vmatprep.subr.mxu0 0.0
        %1821 = vmatpush2.msra.mxu0 0.0
        %1822 = vmatprep.subr.mxu0 0.0
        %1823 = vmatpush2.msra.mxu0 0.0
        %1824 = vmatprep.subr.mxu0 0.0
        %1825 = vmatpush2.msra.mxu0 0.0
        %1826 = vmatprep.subr.mxu0 0.0
        %1827 = vmatpush2.msra.mxu0 0.0
        %1828 = vmatprep.subr.mxu0 0.0
        %1829 = vmatpush2.msra.mxu0 0.0
        %1830 = vmatprep.subr.mxu0 0.0
        %1831 = vmatpush2.msra.mxu0 0.0
        %1832 = vmatprep.subr.mxu0 0.0
        %1833 = vmatpush2.msra.mxu0 0.0
        %1834 = vmatprep.subr.mxu0 0.0
        %1835 = vmatpush2.msra.mxu0 0.0
        %1836 = vmatprep.subr.mxu0 0.0
        %1837 = vmatpush2.msra.mxu0 0.0
        %1838 = vmatprep.subr.mxu0 0.0
        %1839 = vmatpush2.msra.mxu0 0.0
        %1840 = vmatprep.subr.mxu0 0.0
        %1841 = vmatpush2.msra.mxu0 0.0
        %1842 = vmatprep.subr.mxu0 0.0
        %1843 = vmatpush2.msra.mxu0 0.0
        %1844 = vmatprep.subr.mxu0 0.0
        %1845 = vmatpush2.msra.mxu0 0.0
        %1846 = vmatprep.mubr.f32.mxu0 0.0
        %1847 = vmatmul.mubr.f32.gmra.mxu0 %v1703
        %v1848 = vpop.f32.mrf.mxu0
        %v1849 = vadd.f32 0.0, %v1848
        %v1850 = vpop.f32.mrf.mxu0
        %1851 = vdwg.mxu0
        %v1852 = vadd.f32 %v1681, %v1778
        %v1853 = vadd.f32 %v1682, %v1780
        %v1854 = vadd.f32 %v1683, %v1849
        %v1855 = vld [vmem:[%s5] sm:$0xff]
        %1857 = vset.pattern.permute.xlu0 0
        %1858 = vperm.xlu0 %1857, %v1855
        %v1859 = vpop.permute.xlu0 %1858
        %v1861 = vadd.f32 %v1852, %v1859
        %v1862 = vadd.f32 %v1853, %v1859
        %v1863 = vadd.f32 %v1854, %v1859
        %v1866 = vmul.f32 %v287, %v1861
        %v1867 = vmul.f32 %v291, %v1862
        %v1868 = vmul.f32 %v295, %v1863
        %1869 = vst [vmem:[%s244] sm:$0xff] %v1866
        %1870 = vst [vmem:[%s244 + $0x8] sm:$0xff] %v1867
        %1871 = vst [vmem:[%s244 + $0x10] sm:$0xff] %v1868
        %s1872 = sand.u32 %s159, 1
        %s1873 = scalar_lea.sflag [#allocation4], %s1872
        %s1874 = sand.u32 %s159, 1
        %s1875 = smul.addr %s1874, 24
        %s1876 = scalar_lea.vmem [#allocation3], %s1875
        // Predicated region
        $region45: #{tpu_custom_call.1} parent=43 // pred_check
          %p1877 = pneg %p169
        $region46: #{tpu_custom_call.1} parent=43 // pred_check_branch
          %1879 = sbr.rel (%p1877) target = $region48
        $region47: #{tpu_custom_call.1} parent=43 // pred_region
          %s1881 = ssub.s32 384, 384
          %1882 = vsyncadd %s1873, %s1881
          %s1883 = smul.addr %s20, 3
          %s1884 = smul.addr %s1883, 128
          %s1885 = scalar_lea.hbm %s6, %s1884
          %s1887 = sshll.u32 %s1876, 4
          %s1888 = int_to_ptr.vmem [resolvable:$true] %s1887
          %1890 = dma.vmem_to_hbm [thread:$0]  %s1888, 384, %s1885, %s1873
        $region48: #{tpu_custom_call.1} parent=43 // pred_fallthru
          _
      $region44: #{tpu_custom_call.1} parent=5 // pred_fallthru
        _
      %p1891 = scmp.le.s32.totalorder 2, %s15
      // Predicated region
      $region49: #{tpu_custom_call.1} parent=5 // pred_check
        %p1892 = pneg %p1891
      $region50: #{tpu_custom_call.1} parent=5 // pred_check_branch
        %1894 = sbr.rel (%p1892) target = $region52
      $region51: #{tpu_custom_call.1} parent=5 // pred_region
        %s1895 = ssub.s32 %s15, 2
        // Predicated region
        $region53: #{tpu_custom_call.1} parent=51 // pred_check
          %p1896 = pneg %p175
        $region54: #{tpu_custom_call.1} parent=51 // pred_check_branch
          %1898 = sbr.rel (%p1896) target = $region56
        $region55: #{tpu_custom_call.1} parent=51 // pred_region
          %s1899 = sand.u32 %s160, 1
          %s1900 = scalar_lea.sflag [#allocation4], %s1899
          %s1901 = sand.u32 %s160, 1
          %s1902 = smul.addr %s1901, 24
          %s1903 = scalar_lea.vmem [#allocation3], %s1902
          %1904 = dma.done %s1900, 384
        $region56: #{tpu_custom_call.1} parent=51 // pred_fallthru
          _
      $region52: #{tpu_custom_call.1} parent=5 // pred_fallthru
        _
    $region6: #{tpu_custom_call.1} parent=1 // loop_footer
      %s19 = sadd.s32 1, %s15
    $region7: #{tpu_custom_call.1} parent=1 // loop_footer_branch
      %14 = sbr.rel target = $region3
    $region8: #{tpu_custom_call.1} parent=1 // loop_exit
      _
    %1905 = vsyncpa [#allocation4], 1
    %s1906 = scalar_lea.sflag [#allocation4], 1
    %1907 = vsyncpa %s1906, 1

</llo_original>
